<compile_context>
chip_gen: v7x
topology: tpu7x:2x2x1
jax: 0.10.0
libtpu: 0.0.40
codegen_flags: <defaults>
</compile_context>

<pallas_src>
import jax
import jax.numpy as jnp
from jax import lax
from jax.experimental import pallas as pl
from jax.experimental.pallas import tpu as pltpu


def node_network_kernel(msg_ref, hid_ref, glb_ref,
                        w1m_ref, w1h_ref, w1g_ref, b1_ref,
                        w2_ref, b2_ref, w3_ref, b3_ref,
                        out_ref):
    cdt = w1m_ref.dtype  # compute dtype (bf16); activations cast in-kernel

    # Layer 1: message-sum + 3-way concat folded into three MXU partial
    # matmuls against pre-sliced / pre-tiled W1 pieces, f32 accumulation.
    h = jnp.dot(msg_ref[...].astype(cdt), w1m_ref[...],
                preferred_element_type=jnp.float32)
    h = h + jnp.dot(hid_ref[...].astype(cdt), w1h_ref[...],
                    preferred_element_type=jnp.float32)
    h = h + jnp.dot(glb_ref[...].astype(cdt), w1g_ref[...],
                    preferred_element_type=jnp.float32)
    h = jnp.maximum(h + b1_ref[...], 0.0).astype(w2_ref.dtype)

    # Layer 2
    h = jnp.dot(h, w2_ref[...], preferred_element_type=jnp.float32) + b2_ref[...]
    h = jnp.maximum(h, 0.0).astype(w3_ref.dtype)

    # Layer 3 (f32 accumulation)
    out = jnp.dot(h, w3_ref[...], preferred_element_type=jnp.float32) + b3_ref[...]

    # Per-row L2 ("fro" over dim=1) normalization, keepdim.  rsqrt -> EUP slot.
    # NOTE: no epsilon, matching torch.norm (an all-zero row would give NaN).
    inv_norm = lax.rsqrt(jnp.sum(out * out, axis=1, keepdims=True))
    out_ref[...] = (out * inv_norm).astype(out_ref.dtype)


def _round_up(x, m):
    return ((x + m - 1) // m) * m


def prepare_params(params, num_messages, compute_dtype=jnp.bfloat16):
    """One-time (per-model) weight prep, hoisted out of the per-call path.

    Returns (w1_msg, w1_hid, w1_glb, b1, w2, b2, w3, b3) where
      w1_msg = tile(w1[:D], M)  [M*D, L0]  -- folds the message sum into matmul
      w1_hid = w1[D:2D]         [D,   L0]
      w1_glb = w1[2D:3D]        [D,   L0]
    Weights are cast to the bf16 MXU operand dtype, biases kept in f32.
    """
    w1, b1, w2, b2, w3, b3 = params
    d3 = w1.shape[0]
    assert d3 % 3 == 0, "first-layer weight must have 3*inputsize rows"
    d = d3 // 3
    w1_msg = jnp.tile(w1[:d], (num_messages, 1)).astype(compute_dtype)
    w1_hid = w1[d:2 * d].astype(compute_dtype)
    w1_glb = w1[2 * d:].astype(compute_dtype)
    return (w1_msg, w1_hid, w1_glb,
            b1.astype(jnp.float32),
            w2.astype(compute_dtype), b2.astype(jnp.float32),
            w3.astype(compute_dtype), b3.astype(jnp.float32))


def node_network_forward(messages, hidden_rep, global_rep, prepared_params, *,
                         out_dtype=jnp.float32, max_tile_n=512):
    """messages [N,M,D], hidden_rep/global_rep [N,D]; prepared_params from
    prepare_params().  Returns the normalized hidden rep, shape [N, out_dim]."""
    w1m, w1h, w1g, b1, w2, b2, w3, b3 = prepared_params
    n, m, d = messages.shape
    md = m * d
    l0 = w1m.shape[1]
    l1 = w2.shape[1]
    out_dim = w3.shape[1]

    # bf16 packs 2 rows per sublane -> align row count to 16.  Small N (<=512
    # after padding) runs as ONE grid step; large N streams max_tile_n-row tiles.
    row_align = 16
    n_pad = _round_up(n, row_align)
    if n_pad <= max_tile_n:
        tile_n = n_pad
    else:
        tile_n = max_tile_n
        n_pad = _round_up(n, tile_n)
    grid_n = n_pad // tile_n

    msg_flat = messages.reshape(n, md)          # contiguous view, no copy
    if n_pad != n:
        pad = ((0, n_pad - n), (0, 0))
        msg_flat = jnp.pad(msg_flat, pad)
        hidden_rep = jnp.pad(hidden_rep, pad)
        global_rep = jnp.pad(global_rep, pad)

    # Streaming activations: one row-tile per grid step.
    row_spec = lambda width: pl.BlockSpec((tile_n, width), lambda i: (i, 0))
    # Grid-invariant weights/biases: constant block index -> VMEM-resident.
    const_spec = lambda shape: pl.BlockSpec(shape, lambda i: (0, 0))

    itemsize = lambda a: a.size * jnp.dtype(a.dtype).itemsize
    flops = 2 * n_pad * (md * l0 + 2 * d * l0 + l0 * l1 + l1 * out_dim)
    bytes_accessed = (sum(itemsize(a) for a in
                          (msg_flat, hidden_rep, global_rep,
                           w1m, w1h, w1g, b1, w2, b2, w3, b3))
                      + n_pad * out_dim * jnp.dtype(out_dtype).itemsize)

    out = pl.pallas_call(
        node_network_kernel,
        out_shape=jax.ShapeDtypeStruct((n_pad, out_dim), out_dtype),
        grid=(grid_n,),
        in_specs=[
            row_spec(md), row_spec(d), row_spec(d),
            const_spec((md, l0)), const_spec((d, l0)), const_spec((d, l0)),
            const_spec((1, l0)),
            const_spec((l0, l1)), const_spec((1, l1)),
            const_spec((l1, out_dim)), const_spec((1, out_dim)),
        ],
        out_specs=pl.BlockSpec((tile_n, out_dim), lambda i: (i, 0)),
        compiler_params=pltpu.CompilerParams(
            # Only shard across TensorCores when there are enough row-tiles to
            # amortize the per-step overhead (v7x 2-TC note from the review).
            dimension_semantics=("parallel",) if grid_n > 1 else ("arbitrary",)),
        cost_estimate=pl.CostEstimate(
            flops=flops, transcendentals=n_pad, bytes_accessed=bytes_accessed),
    )(msg_flat, hidden_rep, global_rep, w1m, w1h, w1g, b1, w2, b2, w3, b3)

    return out[:n]


def reference_forward(messages, hidden_rep, global_rep, params):
    """Exact f32 PyTorch-fidelity reference."""
    w1, b1, w2, b2, w3, b3 = params
    hp = lax.Precision.HIGHEST
    agg = jnp.sum(messages, axis=1)
    inputs = jnp.concatenate([agg, hidden_rep, global_rep], axis=1)
    h = jnp.maximum(jnp.dot(inputs, w1, precision=hp) + b1, 0.0)
    h = jnp.maximum(jnp.dot(h, w2, precision=hp) + b2, 0.0)
    out = jnp.dot(h, w3, precision=hp) + b3
    return out / jnp.linalg.norm(out, axis=1, keepdims=True)


def quantized_reference(messages, hidden_rep, global_rep, params):
    """Mirrors kernel numerics: bf16 matmul operands, f32 accumulation, the
    message sum folded into a tiled-W1 matmul, three layer-1 partial dots."""
    w1, b1, w2, b2, w3, b3 = params
    n, m, d = messages.shape
    hp = lax.Precision.HIGHEST
    q = lambda a: a.astype(jnp.bfloat16).astype(jnp.float32)
    h = (jnp.dot(q(messages.reshape(n, m * d)), q(jnp.tile(w1[:d], (m, 1))),
                 precision=hp)
         + jnp.dot(q(hidden_rep), q(w1[d:2 * d]), precision=hp)
         + jnp.dot(q(global_rep), q(w1[2 * d:]), precision=hp)
         + b1)
    h = jnp.maximum(h, 0.0)
    h = jnp.maximum(jnp.dot(q(h), q(w2), precision=hp) + b2, 0.0)
    out = jnp.dot(q(h), q(w3), precision=hp) + b3
    return out * lax.rsqrt(jnp.sum(out * out, axis=1, keepdims=True))


if __name__ == "__main__":
    # Module config: NodeNetwork(inputsize=32, outputsize=32, layers=[64, 64])
    inputsize = 32
    outputsize = 32
    layers = [64, 64]

    N = 256   # nodes
    M = 4     # incoming messages per node

    key = jax.random.PRNGKey(0)
    (k_msg, k_hid, k_glb,
     k_w1, k_b1, k_w2, k_b2, k_w3, k_b3) = jax.random.split(key, 9)

    messages   = jax.random.normal(k_msg, (N, M, inputsize), dtype=jnp.float32)
    hidden_rep = jax.random.normal(k_hid, (N, inputsize), dtype=jnp.float32)
    global_rep = jax.random.normal(k_glb, (N, inputsize), dtype=jnp.float32)

    in0 = 3 * inputsize
    # Deterministic synthetic parameters; weights [in, out], biases [1, out].
    w1 = jax.random.normal(k_w1, (in0, layers[0]), dtype=jnp.float32) * 0.1
    b1 = jax.random.normal(k_b1, (1, layers[0]), dtype=jnp.float32) * 0.1
    w2 = jax.random.normal(k_w2, (layers[0], layers[1]), dtype=jnp.float32) * 0.1
    b2 = jax.random.normal(k_b2, (1, layers[1]), dtype=jnp.float32) * 0.1
    w3 = jax.random.normal(k_w3, (layers[1], outputsize), dtype=jnp.float32) * 0.1
    b3 = jax.random.normal(k_b3, (1, outputsize), dtype=jnp.float32) * 0.1
    params = (w1, b1, w2, b2, w3, b3)

    # One-time weight prep (hoisted out of the per-call path; reuse `prepared`
    # across forward calls).
    prepared = jax.block_until_ready(prepare_params(params, num_messages=M))

    fwd = jax.jit(node_network_forward)
    out = jax.block_until_ready(fwd(messages, hidden_rep, global_rep, prepared))

    assert out.shape == (N, outputsize)
    assert not bool(jnp.any(jnp.isnan(out)))

    # 1) Against the exact f32 reference: tolerance reflects bf16 operand
    #    rounding (~2^-8 relative) through three layers.
    ref = reference_forward(messages, hidden_rep, global_rep, params)
    assert jnp.allclose(out, ref, atol=2e-2, rtol=2e-2), "mismatch vs f32 reference"

    # 2) Against a reference that rounds matmul operands to bf16 exactly like
    #    the kernel (f32 accumulation) -> only accumulation-order noise remains.
    ref_q = quantized_reference(messages, hidden_rep, global_rep, params)
    assert jnp.allclose(out, ref_q, atol=2e-3, rtol=2e-3), "mismatch vs bf16-quantized reference"

    # 3) Output rows must be unit-norm.
    norms = jnp.linalg.norm(out, axis=1)
    assert jnp.allclose(norms, 1.0, atol=1e-3), "row norms not 1"

    print("KERNEL_OK")
</pallas_src>

<mosaic_0001>
module attributes {stable_mosaic.version = 11 : i64} {
  func.func @node_network_kernel(%arg0: i32, %arg1: memref<256x128xf32, #tpu.memory_space<vmem>>, %arg2: memref<256x32xf32, #tpu.memory_space<vmem>>, %arg3: memref<256x32xf32, #tpu.memory_space<vmem>>, %arg4: memref<128x64xbf16, #tpu.memory_space<vmem>>, %arg5: memref<32x64xbf16, #tpu.memory_space<vmem>>, %arg6: memref<32x64xbf16, #tpu.memory_space<vmem>>, %arg7: memref<1x64xf32, #tpu.memory_space<vmem>>, %arg8: memref<64x64xbf16, #tpu.memory_space<vmem>>, %arg9: memref<1x64xf32, #tpu.memory_space<vmem>>, %arg10: memref<64x32xbf16, #tpu.memory_space<vmem>>, %arg11: memref<1x32xf32, #tpu.memory_space<vmem>>, %arg12: memref<256x32xf32, #tpu.memory_space<vmem>>) attributes {dimension_semantics = [#tpu.dimension_semantics<arbitrary>], iteration_bounds = array<i64: 1>, scalar_prefetch = 0 : i64, scratch_operands = 0 : i64, tpu.core_type = #tpu.core_type<tc>, window_params = [{transform_indices = @transform_0, window_bounds = array<i64: 256, 128>}, {transform_indices = @transform_1, window_bounds = array<i64: 256, 32>}, {transform_indices = @transform_2, window_bounds = array<i64: 256, 32>}, {pipeline_mode = #tpu.pipeline_mode<synchronous>, transform_indices = @transform_3, window_bounds = array<i64: 128, 64>}, {pipeline_mode = #tpu.pipeline_mode<synchronous>, transform_indices = @transform_4, window_bounds = array<i64: 32, 64>}, {pipeline_mode = #tpu.pipeline_mode<synchronous>, transform_indices = @transform_5, window_bounds = array<i64: 32, 64>}, {pipeline_mode = #tpu.pipeline_mode<synchronous>, transform_indices = @transform_6, window_bounds = array<i64: 1, 64>}, {pipeline_mode = #tpu.pipeline_mode<synchronous>, transform_indices = @transform_7, window_bounds = array<i64: 64, 64>}, {pipeline_mode = #tpu.pipeline_mode<synchronous>, transform_indices = @transform_8, window_bounds = array<i64: 1, 64>}, {pipeline_mode = #tpu.pipeline_mode<synchronous>, transform_indices = @transform_9, window_bounds = array<i64: 64, 32>}, {pipeline_mode = #tpu.pipeline_mode<synchronous>, transform_indices = @transform_10, window_bounds = array<i64: 1, 32>}, {transform_indices = @transform_11, window_bounds = array<i64: 256, 32>}]} {
    %c0 = arith.constant 0 : index
    %c0_0 = arith.constant 0 : index
    %0 = vector.load %arg1[%c0, %c0_0] : memref<256x128xf32, #tpu.memory_space<vmem>>, vector<256x128xf32>
    %1 = arith.truncf %0 : vector<256x128xf32> to vector<256x128xbf16>
    %c0_1 = arith.constant 0 : index
    %c0_2 = arith.constant 0 : index
    %2 = vector.load %arg4[%c0_1, %c0_2] : memref<128x64xbf16, #tpu.memory_space<vmem>>, vector<128x64xbf16>
    %cst = arith.constant dense<0.000000e+00> : vector<256x64xf32>
    %3 = tpu.matmul %1, %2, %cst {dimension_numbers = #tpu.dot_dimension_numbers<[1], [0], [0], [1], [0, 0, 1, 1], [], []>} : vector<256x128xbf16>, vector<128x64xbf16>, vector<256x64xf32> -> vector<256x64xf32>
    %c0_3 = arith.constant 0 : index
    %c0_4 = arith.constant 0 : index
    %4 = vector.load %arg2[%c0_3, %c0_4] : memref<256x32xf32, #tpu.memory_space<vmem>>, vector<256x32xf32>
    %5 = arith.truncf %4 : vector<256x32xf32> to vector<256x32xbf16>
    %c0_5 = arith.constant 0 : index
    %c0_6 = arith.constant 0 : index
    %6 = vector.load %arg5[%c0_5, %c0_6] : memref<32x64xbf16, #tpu.memory_space<vmem>>, vector<32x64xbf16>
    %cst_7 = arith.constant dense<0.000000e+00> : vector<256x64xf32>
    %7 = tpu.matmul %5, %6, %cst_7 {dimension_numbers = #tpu.dot_dimension_numbers<[1], [0], [0], [1], [0, 0, 1, 1], [], []>} : vector<256x32xbf16>, vector<32x64xbf16>, vector<256x64xf32> -> vector<256x64xf32>
    %8 = arith.addf %3, %7 : vector<256x64xf32>
    %c0_8 = arith.constant 0 : index
    %c0_9 = arith.constant 0 : index
    %9 = vector.load %arg3[%c0_8, %c0_9] : memref<256x32xf32, #tpu.memory_space<vmem>>, vector<256x32xf32>
    %10 = arith.truncf %9 : vector<256x32xf32> to vector<256x32xbf16>
    %c0_10 = arith.constant 0 : index
    %c0_11 = arith.constant 0 : index
    %11 = vector.load %arg6[%c0_10, %c0_11] : memref<32x64xbf16, #tpu.memory_space<vmem>>, vector<32x64xbf16>
    %cst_12 = arith.constant dense<0.000000e+00> : vector<256x64xf32>
    %12 = tpu.matmul %10, %11, %cst_12 {dimension_numbers = #tpu.dot_dimension_numbers<[1], [0], [0], [1], [0, 0, 1, 1], [], []>} : vector<256x32xbf16>, vector<32x64xbf16>, vector<256x64xf32> -> vector<256x64xf32>
    %13 = arith.addf %8, %12 : vector<256x64xf32>
    %c0_13 = arith.constant 0 : index
    %c0_14 = arith.constant 0 : index
    %14 = vector.load %arg7[%c0_13, %c0_14] : memref<1x64xf32, #tpu.memory_space<vmem>>, vector<1x64xf32>
    %15 = vector.broadcast %14 : vector<1x64xf32> to vector<256x64xf32>
    %16 = arith.addf %13, %15 : vector<256x64xf32>
    %cst_15 = arith.constant 0.000000e+00 : f32
    %17 = vector.broadcast %cst_15 : f32 to vector<256x64xf32>
    %18 = arith.maximumf %16, %17 : vector<256x64xf32>
    %19 = arith.truncf %18 : vector<256x64xf32> to vector<256x64xbf16>
    %c0_16 = arith.constant 0 : index
    %c0_17 = arith.constant 0 : index
    %20 = vector.load %arg8[%c0_16, %c0_17] : memref<64x64xbf16, #tpu.memory_space<vmem>>, vector<64x64xbf16>
    %cst_18 = arith.constant dense<0.000000e+00> : vector<256x64xf32>
    %21 = tpu.matmul %19, %20, %cst_18 {dimension_numbers = #tpu.dot_dimension_numbers<[1], [0], [0], [1], [0, 0, 1, 1], [], []>} : vector<256x64xbf16>, vector<64x64xbf16>, vector<256x64xf32> -> vector<256x64xf32>
    %c0_19 = arith.constant 0 : index
    %c0_20 = arith.constant 0 : index
    %22 = vector.load %arg9[%c0_19, %c0_20] : memref<1x64xf32, #tpu.memory_space<vmem>>, vector<1x64xf32>
    %23 = vector.broadcast %22 : vector<1x64xf32> to vector<256x64xf32>
    %24 = arith.addf %21, %23 : vector<256x64xf32>
    %cst_21 = arith.constant 0.000000e+00 : f32
    %25 = vector.broadcast %cst_21 : f32 to vector<256x64xf32>
    %26 = arith.maximumf %24, %25 : vector<256x64xf32>
    %27 = arith.truncf %26 : vector<256x64xf32> to vector<256x64xbf16>
    %c0_22 = arith.constant 0 : index
    %c0_23 = arith.constant 0 : index
    %28 = vector.load %arg10[%c0_22, %c0_23] : memref<64x32xbf16, #tpu.memory_space<vmem>>, vector<64x32xbf16>
    %cst_24 = arith.constant dense<0.000000e+00> : vector<256x32xf32>
    %29 = tpu.matmul %27, %28, %cst_24 {dimension_numbers = #tpu.dot_dimension_numbers<[1], [0], [0], [1], [0, 0, 1, 1], [], []>} : vector<256x64xbf16>, vector<64x32xbf16>, vector<256x32xf32> -> vector<256x32xf32>
    %c0_25 = arith.constant 0 : index
    %c0_26 = arith.constant 0 : index
    %30 = vector.load %arg11[%c0_25, %c0_26] : memref<1x32xf32, #tpu.memory_space<vmem>>, vector<1x32xf32>
    %31 = vector.broadcast %30 : vector<1x32xf32> to vector<256x32xf32>
    %32 = arith.addf %29, %31 : vector<256x32xf32>
    %33 = arith.mulf %32, %32 : vector<256x32xf32>
    %cst_27 = arith.constant dense<0.000000e+00> : vector<256xf32>
    %34 = vector.multi_reduction <add>, %33, %cst_27 [1] : vector<256x32xf32> to vector<256xf32>
    %35 = vector.shape_cast %34 : vector<256xf32> to vector<256x1xf32>
    %36 = math.rsqrt %35 : vector<256x1xf32>
    %37 = vector.broadcast %36 : vector<256x1xf32> to vector<256x32xf32>
    %38 = arith.mulf %32, %37 : vector<256x32xf32>
    %c0_28 = arith.constant 0 : index
    %c0_29 = arith.constant 0 : index
    %39 = vector.load %arg12[%c0_28, %c0_29] : memref<256x32xf32, #tpu.memory_space<vmem>>, vector<256x32xf32>
    tpu.vector_store %arg12[%c0_28, %c0_29], %38 {strides = array<i32>} : memref<256x32xf32, #tpu.memory_space<vmem>>, vector<256x32xf32>,
    return
  }
  func.func @transform_0(%arg0: i32) -> (i32, i32) {
    %c0_i32 = arith.constant 0 : i32
    %c0_i32_0 = arith.constant 0 : i32
    return %arg0, %c0_i32 : i32, i32
  }
  func.func @transform_1(%arg0: i32) -> (i32, i32) {
    %c0_i32 = arith.constant 0 : i32
    %c0_i32_0 = arith.constant 0 : i32
    return %arg0, %c0_i32 : i32, i32
  }
  func.func @transform_2(%arg0: i32) -> (i32, i32) {
    %c0_i32 = arith.constant 0 : i32
    %c0_i32_0 = arith.constant 0 : i32
    return %arg0, %c0_i32 : i32, i32
  }
  func.func @transform_3(%arg0: i32) -> (i32, i32) {
    %c0_i32 = arith.constant 0 : i32
    %c0_i32_0 = arith.constant 0 : i32
    %c0_i32_1 = arith.constant 0 : i32
    return %c0_i32, %c0_i32_0 : i32, i32
  }
  func.func @transform_4(%arg0: i32) -> (i32, i32) {
    %c0_i32 = arith.constant 0 : i32
    %c0_i32_0 = arith.constant 0 : i32
    %c0_i32_1 = arith.constant 0 : i32
    return %c0_i32, %c0_i32_0 : i32, i32
  }
  func.func @transform_5(%arg0: i32) -> (i32, i32) {
    %c0_i32 = arith.constant 0 : i32
    %c0_i32_0 = arith.constant 0 : i32
    %c0_i32_1 = arith.constant 0 : i32
    return %c0_i32, %c0_i32_0 : i32, i32
  }
  func.func @transform_6(%arg0: i32) -> (i32, i32) {
    %c0_i32 = arith.constant 0 : i32
    %c0_i32_0 = arith.constant 0 : i32
    %c0_i32_1 = arith.constant 0 : i32
    return %c0_i32, %c0_i32_0 : i32, i32
  }
  func.func @transform_7(%arg0: i32) -> (i32, i32) {
    %c0_i32 = arith.constant 0 : i32
    %c0_i32_0 = arith.constant 0 : i32
    %c0_i32_1 = arith.constant 0 : i32
    return %c0_i32, %c0_i32_0 : i32, i32
  }
  func.func @transform_8(%arg0: i32) -> (i32, i32) {
    %c0_i32 = arith.constant 0 : i32
    %c0_i32_0 = arith.constant 0 : i32
    %c0_i32_1 = arith.constant 0 : i32
    return %c0_i32, %c0_i32_0 : i32, i32
  }
  func.func @transform_9(%arg0: i32) -> (i32, i32) {
    %c0_i32 = arith.constant 0 : i32
    %c0_i32_0 = arith.constant 0 : i32
    %c0_i32_1 = arith.constant 0 : i32
    return %c0_i32, %c0_i32_0 : i32, i32
  }
  func.func @transform_10(%arg0: i32) -> (i32, i32) {
    %c0_i32 = arith.constant 0 : i32
    %c0_i32_0 = arith.constant 0 : i32
    %c0_i32_1 = arith.constant 0 : i32
    return %c0_i32, %c0_i32_0 : i32, i32
  }
  func.func @transform_11(%arg0: i32) -> (i32, i32) {
    %c0_i32 = arith.constant 0 : i32
    %c0_i32_0 = arith.constant 0 : i32
    return %arg0, %c0_i32 : i32, i32
  }
}

</mosaic_0001>

<llo_original>
// kernel: node_network_forward.1
$region0: #{node_network_forward.1}
  #allocation0 [shape = 'u32[]', space=smem, size = 0x4, offset = 0x4, fixed_abs, tag = 'smem constant byte address 0x4 - core index']
  #allocation1 [shape = 'u32[144,128]{1,0:T(1,128)}', space=vmem, size = 0x12000, scoped, tag = 'internal scratch']
  %s0 = inlined_call_operand.vmem [shape: f32[256,128], index: 0, kind: input, shape index: {}]
  %s1 = inlined_call_operand.vmem [shape: f32[256,32], index: 1, kind: input, shape index: {}]
  %s2 = inlined_call_operand.vmem [shape: f32[256,32], index: 2, kind: input, shape index: {}]
  %s3 = inlined_call_operand.vmem [shape: bf16[128,64], index: 3, kind: input, shape index: {}]
  %s4 = inlined_call_operand.vmem [shape: bf16[32,64], index: 4, kind: input, shape index: {}]
  %s5 = inlined_call_operand.vmem [shape: bf16[32,64], index: 5, kind: input, shape index: {}]
  %s6 = inlined_call_operand.vmem [shape: f32[1,64], index: 6, kind: input, shape index: {}]
  %s7 = inlined_call_operand.vmem [shape: bf16[64,64], index: 7, kind: input, shape index: {}]
  %s8 = inlined_call_operand.vmem [shape: f32[1,64], index: 8, kind: input, shape index: {}]
  %s9 = inlined_call_operand.vmem [shape: bf16[64,32], index: 9, kind: input, shape index: {}]
  %s10 = inlined_call_operand.vmem [shape: f32[1,32], index: 10, kind: input, shape index: {}]
  %s11 = inlined_call_operand.vmem [shape: f32[256,32], index: 11, kind: output, shape index: {}]
  %s12 = sld [smem:[#allocation0]]
  $region54: #{node_network_forward.1} parent=0
    _
  %s14 = ssub.s32 1, %s12
  %s15 = scalar_select 0, %s14, %s12
  // Predicated region
  $region2: #{node_network_forward.1} parent=0 // pred_check
    _
  $region3: #{node_network_forward.1} parent=0 // pred_check_branch
    %17 = sbr.rel (0) target = $region5
  $region4: #{node_network_forward.1} parent=0 // pred_region
    _
  $region5: #{node_network_forward.1} parent=0 // pred_fallthru
    _
  // Predicated region
  $region6: #{node_network_forward.1} parent=0 // pred_check
    _
  $region7: #{node_network_forward.1} parent=0 // pred_check_branch
    %19 = sbr.rel (0) target = $region9
  $region8: #{node_network_forward.1} parent=0 // pred_region
    _
  $region9: #{node_network_forward.1} parent=0 // pred_fallthru
    _
  // Predicated region
  $region10: #{node_network_forward.1} parent=0 // pred_check
    _
  $region11: #{node_network_forward.1} parent=0 // pred_check_branch
    %21 = sbr.rel (0) target = $region13
  $region12: #{node_network_forward.1} parent=0 // pred_region
    _
  $region13: #{node_network_forward.1} parent=0 // pred_fallthru
    _
  // Predicated region
  $region14: #{node_network_forward.1} parent=0 // pred_check
    _
  $region15: #{node_network_forward.1} parent=0 // pred_check_branch
    %23 = sbr.rel (0) target = $region17
  $region16: #{node_network_forward.1} parent=0 // pred_region
    _
  $region17: #{node_network_forward.1} parent=0 // pred_fallthru
    _
  // Predicated region
  $region18: #{node_network_forward.1} parent=0 // pred_check
    _
  $region19: #{node_network_forward.1} parent=0 // pred_check_branch
    %25 = sbr.rel (0) target = $region21
  $region20: #{node_network_forward.1} parent=0 // pred_region
    _
  $region21: #{node_network_forward.1} parent=0 // pred_fallthru
    _
  // Predicated region
  $region22: #{node_network_forward.1} parent=0 // pred_check
    _
  $region23: #{node_network_forward.1} parent=0 // pred_check_branch
    %27 = sbr.rel (0) target = $region25
  $region24: #{node_network_forward.1} parent=0 // pred_region
    _
  $region25: #{node_network_forward.1} parent=0 // pred_fallthru
    _
  // Predicated region
  $region26: #{node_network_forward.1} parent=0 // pred_check
    _
  $region27: #{node_network_forward.1} parent=0 // pred_check_branch
    %29 = sbr.rel (0) target = $region29
  $region28: #{node_network_forward.1} parent=0 // pred_region
    _
  $region29: #{node_network_forward.1} parent=0 // pred_fallthru
    _
  // Predicated region
  $region30: #{node_network_forward.1} parent=0 // pred_check
    _
  $region31: #{node_network_forward.1} parent=0 // pred_check_branch
    %31 = sbr.rel (0) target = $region33
  $region32: #{node_network_forward.1} parent=0 // pred_region
    _
  $region33: #{node_network_forward.1} parent=0 // pred_fallthru
    _
  // Predicated region
  $region34: #{node_network_forward.1} parent=0 // pred_check
    _
  $region35: #{node_network_forward.1} parent=0 // pred_check_branch
    %33 = sbr.rel (0) target = $region37
  $region36: #{node_network_forward.1} parent=0 // pred_region
    _
  $region37: #{node_network_forward.1} parent=0 // pred_fallthru
    _
  // Predicated region
  $region38: #{node_network_forward.1} parent=0 // pred_check
    _
  $region39: #{node_network_forward.1} parent=0 // pred_check_branch
    %35 = sbr.rel (0) target = $region41
  $region40: #{node_network_forward.1} parent=0 // pred_region
    _
  $region41: #{node_network_forward.1} parent=0 // pred_fallthru
    _
  // Predicated region
  $region42: #{node_network_forward.1} parent=0 // pred_check
    _
  $region43: #{node_network_forward.1} parent=0 // pred_check_branch
    %37 = sbr.rel (0) target = $region45
  $region44: #{node_network_forward.1} parent=0 // pred_region
    _
  $region45: #{node_network_forward.1} parent=0 // pred_fallthru
    _
  %v39 = vld [vmem:[%s0] sm:$0xff]
  %v40 = vld [vmem:[%s0 + $0x8] sm:$0xff]
  %v41 = vld [vmem:[%s0 + $0x10] sm:$0xff]
  %v42 = vld [vmem:[%s0 + $0x18] sm:$0xff]
  %v43 = vld [vmem:[%s0 + $0x20] sm:$0xff]
  %v44 = vld [vmem:[%s0 + $0x28] sm:$0xff]
  %v45 = vld [vmem:[%s0 + $0x30] sm:$0xff]
  %v46 = vld [vmem:[%s0 + $0x38] sm:$0xff]
  %v47 = vld [vmem:[%s0 + $0x40] sm:$0xff]
  %v48 = vld [vmem:[%s0 + $0x48] sm:$0xff]
  %v49 = vld [vmem:[%s0 + $0x50] sm:$0xff]
  %v50 = vld [vmem:[%s0 + $0x58] sm:$0xff]
  %v51 = vld [vmem:[%s0 + $0x60] sm:$0xff]
  %v52 = vld [vmem:[%s0 + $0x68] sm:$0xff]
  %v53 = vld [vmem:[%s0 + $0x70] sm:$0xff]
  %v54 = vld [vmem:[%s0 + $0x78] sm:$0xff]
  %v55 = vld [vmem:[%s0 + $0x80] sm:$0xff]
  %v56 = vld [vmem:[%s0 + $0x88] sm:$0xff]
  %v57 = vld [vmem:[%s0 + $0x90] sm:$0xff]
  %v58 = vld [vmem:[%s0 + $0x98] sm:$0xff]
  %v59 = vld [vmem:[%s0 + $0xa0] sm:$0xff]
  %v60 = vld [vmem:[%s0 + $0xa8] sm:$0xff]
  %v61 = vld [vmem:[%s0 + $0xb0] sm:$0xff]
  %v62 = vld [vmem:[%s0 + $0xb8] sm:$0xff]
  %v63 = vld [vmem:[%s0 + $0xc0] sm:$0xff]
  %v64 = vld [vmem:[%s0 + $0xc8] sm:$0xff]
  %v65 = vld [vmem:[%s0 + $0xd0] sm:$0xff]
  %v66 = vld [vmem:[%s0 + $0xd8] sm:$0xff]
  %v67 = vld [vmem:[%s0 + $0xe0] sm:$0xff]
  %v68 = vld [vmem:[%s0 + $0xe8] sm:$0xff]
  %v69 = vld [vmem:[%s0 + $0xf0] sm:$0xff]
  %v70 = vld [vmem:[%s0 + $0xf8] sm:$0xff]
  %v71 = vpack.c.bf16 %v40, %v39
  %v72 = vpack.c.bf16 %v42, %v41
  %v73 = vpack.c.bf16 %v44, %v43
  %v74 = vpack.c.bf16 %v46, %v45
  %v75 = vpack.c.bf16 %v48, %v47
  %v76 = vpack.c.bf16 %v50, %v49
  %v77 = vpack.c.bf16 %v52, %v51
  %v78 = vpack.c.bf16 %v54, %v53
  %v79 = vpack.c.bf16 %v56, %v55
  %v80 = vpack.c.bf16 %v58, %v57
  %v81 = vpack.c.bf16 %v60, %v59
  %v82 = vpack.c.bf16 %v62, %v61
  %v83 = vpack.c.bf16 %v64, %v63
  %v84 = vpack.c.bf16 %v66, %v65
  %v85 = vpack.c.bf16 %v68, %v67
  %v86 = vpack.c.bf16 %v70, %v69
  %v87 = vld [vmem:[%s3] sm:$0xf]
  %v88 = vld [vmem:[%s3 + $0x4] sm:$0xf]
  %v89 = vld [vmem:[%s3 + $0x8] sm:$0xf]
  %v90 = vld [vmem:[%s3 + $0xc] sm:$0xf]
  %v91 = vld [vmem:[%s3 + $0x10] sm:$0xf]
  %v92 = vld [vmem:[%s3 + $0x14] sm:$0xf]
  %v93 = vld [vmem:[%s3 + $0x18] sm:$0xf]
  %v94 = vld [vmem:[%s3 + $0x1c] sm:$0xf]
  %v95 = vld [vmem:[%s3 + $0x20] sm:$0xf]
  %v96 = vld [vmem:[%s3 + $0x24] sm:$0xf]
  %v97 = vld [vmem:[%s3 + $0x28] sm:$0xf]
  %v98 = vld [vmem:[%s3 + $0x2c] sm:$0xf]
  %v99 = vld [vmem:[%s3 + $0x30] sm:$0xf]
  %v100 = vld [vmem:[%s3 + $0x34] sm:$0xf]
  %v101 = vld [vmem:[%s3 + $0x38] sm:$0xf]
  %v102 = vld [vmem:[%s3 + $0x3c] sm:$0xf]
  %v103 = vld [vmem:[%s1] sm:$0xff]
  %v104 = vld [vmem:[%s1 + $0x8] sm:$0xff]
  %v105 = vld [vmem:[%s1 + $0x10] sm:$0xff]
  %v106 = vld [vmem:[%s1 + $0x18] sm:$0xff]
  %v107 = vld [vmem:[%s1 + $0x20] sm:$0xff]
  %v108 = vld [vmem:[%s1 + $0x28] sm:$0xff]
  %v109 = vld [vmem:[%s1 + $0x30] sm:$0xff]
  %v110 = vld [vmem:[%s1 + $0x38] sm:$0xff]
  %v111 = vld [vmem:[%s1 + $0x40] sm:$0xff]
  %v112 = vld [vmem:[%s1 + $0x48] sm:$0xff]
  %v113 = vld [vmem:[%s1 + $0x50] sm:$0xff]
  %v114 = vld [vmem:[%s1 + $0x58] sm:$0xff]
  %v115 = vld [vmem:[%s1 + $0x60] sm:$0xff]
  %v116 = vld [vmem:[%s1 + $0x68] sm:$0xff]
  %v117 = vld [vmem:[%s1 + $0x70] sm:$0xff]
  %v118 = vld [vmem:[%s1 + $0x78] sm:$0xff]
  %v119 = vld [vmem:[%s1 + $0x80] sm:$0xff]
  %v120 = vld [vmem:[%s1 + $0x88] sm:$0xff]
  %v121 = vld [vmem:[%s1 + $0x90] sm:$0xff]
  %v122 = vld [vmem:[%s1 + $0x98] sm:$0xff]
  %v123 = vld [vmem:[%s1 + $0xa0] sm:$0xff]
  %v124 = vld [vmem:[%s1 + $0xa8] sm:$0xff]
  %v125 = vld [vmem:[%s1 + $0xb0] sm:$0xff]
  %v126 = vld [vmem:[%s1 + $0xb8] sm:$0xff]
  %v127 = vld [vmem:[%s1 + $0xc0] sm:$0xff]
  %v128 = vld [vmem:[%s1 + $0xc8] sm:$0xff]
  %v129 = vld [vmem:[%s1 + $0xd0] sm:$0xff]
  %v130 = vld [vmem:[%s1 + $0xd8] sm:$0xff]
  %v131 = vld [vmem:[%s1 + $0xe0] sm:$0xff]
  %v132 = vld [vmem:[%s1 + $0xe8] sm:$0xff]
  %v133 = vld [vmem:[%s1 + $0xf0] sm:$0xff]
  %v134 = vld [vmem:[%s1 + $0xf8] sm:$0xff]
  %v135 = vpack.c.bf16 %v104, %v103
  %v136 = vpack.c.bf16 %v106, %v105
  %v137 = vpack.c.bf16 %v108, %v107
  %v138 = vpack.c.bf16 %v110, %v109
  %v139 = vpack.c.bf16 %v112, %v111
  %v140 = vpack.c.bf16 %v114, %v113
  %v141 = vpack.c.bf16 %v116, %v115
  %v142 = vpack.c.bf16 %v118, %v117
  %v143 = vpack.c.bf16 %v120, %v119
  %v144 = vpack.c.bf16 %v122, %v121
  %v145 = vpack.c.bf16 %v124, %v123
  %v146 = vpack.c.bf16 %v126, %v125
  %v147 = vpack.c.bf16 %v128, %v127
  %v148 = vpack.c.bf16 %v130, %v129
  %v149 = vpack.c.bf16 %v132, %v131
  %v150 = vpack.c.bf16 %v134, %v133
  %v151 = vld [vmem:[%s4] sm:$0xf]
  %v152 = vld [vmem:[%s4 + $0x4] sm:$0xf]
  %v153 = vld [vmem:[%s4 + $0x8] sm:$0xf]
  %v154 = vld [vmem:[%s4 + $0xc] sm:$0xf]
  %v159 = vunpack.c.l.b16 %v151
  %v160 = vunpack.c.l.b16 %v152
  %v161 = vunpack.c.l.b16 %v153
  %v162 = vunpack.c.l.b16 %v154
  %v163 = vpack.c.b16 %v160, %v159
  %v164 = vpack.c.b16 %v162, %v161
  %vm167 = vcmask 261120
  %v169 = vsel %vm167, %v135, 0
  %v172 = vsel %vm167, %v136, 0
  %v175 = vsel %vm167, %v137, 0
  %v178 = vsel %vm167, %v138, 0
  %v181 = vsel %vm167, %v139, 0
  %v184 = vsel %vm167, %v140, 0
  %v187 = vsel %vm167, %v141, 0
  %v190 = vsel %vm167, %v142, 0
  %v193 = vsel %vm167, %v143, 0
  %v196 = vsel %vm167, %v144, 0
  %v199 = vsel %vm167, %v145, 0
  %v202 = vsel %vm167, %v146, 0
  %v205 = vsel %vm167, %v147, 0
  %v208 = vsel %vm167, %v148, 0
  %v211 = vsel %vm167, %v149, 0
  %v214 = vsel %vm167, %v150, 0
  %216 = vmatprep.subr.bf16.mxu0 0
  %217 = vmatpush1.bf16.msra.mxu0 %v163
  %218 = vmatprep.subr.bf16.mxu0 0
  %219 = vmatpush1.bf16.msra.mxu0 %v164
  %220 = vmatprep.subr.bf16.mxu0 0
  %221 = vmatpush1.bf16.msra.mxu0 0
  %222 = vmatprep.subr.bf16.mxu0 0
  %223 = vmatpush1.bf16.msra.mxu0 0
  %224 = vmatprep.subr.bf16.mxu0 0
  %225 = vmatpush1.bf16.msra.mxu0 0
  %226 = vmatprep.subr.bf16.mxu0 0
  %227 = vmatpush1.bf16.msra.mxu0 0
  %228 = vmatprep.subr.bf16.mxu0 0
  %229 = vmatpush1.bf16.msra.mxu0 0
  %230 = vmatprep.subr.bf16.mxu0 0
  %231 = vmatpush1.bf16.msra.mxu0 0
  %232 = vmatprep.subr.bf16.mxu0 0
  %233 = vmatpush1.bf16.msra.mxu0 0
  %234 = vmatprep.subr.bf16.mxu0 0
  %235 = vmatpush1.bf16.msra.mxu0 0
  %236 = vmatprep.subr.bf16.mxu0 0
  %237 = vmatpush1.bf16.msra.mxu0 0
  %238 = vmatprep.subr.bf16.mxu0 0
  %239 = vmatpush1.bf16.msra.mxu0 0
  %240 = vmatprep.subr.bf16.mxu0 0
  %241 = vmatpush1.bf16.msra.mxu0 0
  %242 = vmatprep.subr.bf16.mxu0 0
  %243 = vmatpush1.bf16.msra.mxu0 0
  %244 = vmatprep.subr.bf16.mxu0 0
  %245 = vmatpush1.bf16.msra.mxu0 0
  %246 = vmatprep.subr.bf16.mxu0 0
  %247 = vmatpush1.bf16.msra.mxu0 0
  %248 = vmatprep.mubr.bf16.mxu0 0
  %249 = vmatmul.mubr.bf16.gmra.mrb[0].mxu0 %v169
  %v250 = vpop.f32.mrb[0].mxu0
  %v251 = vadd.f32 0.0, %v250
  %v252 = vpop.f32.mrb[0].mxu0
  %v253 = vpop.f32.mrb[0].mxu0
  %v254 = vadd.f32 0.0, %v253
  %v255 = vpop.f32.mrb[0].mxu0
  %256 = vmatprep.mubr.bf16.mxu0 0
  %257 = vmatmul.mubr.bf16.gmra.mrb[0].mxu0 %v172
  %v258 = vpop.f32.mrb[0].mxu0
  %v259 = vadd.f32 0.0, %v258
  %v260 = vpop.f32.mrb[0].mxu0
  %v261 = vpop.f32.mrb[0].mxu0
  %v262 = vadd.f32 0.0, %v261
  %v263 = vpop.f32.mrb[0].mxu0
  %264 = vmatprep.mubr.bf16.mxu0 0
  %265 = vmatmul.mubr.bf16.gmra.mrb[0].mxu0 %v175
  %v266 = vpop.f32.mrb[0].mxu0
  %v267 = vadd.f32 0.0, %v266
  %v268 = vpop.f32.mrb[0].mxu0
  %v269 = vpop.f32.mrb[0].mxu0
  %v270 = vadd.f32 0.0, %v269
  %v271 = vpop.f32.mrb[0].mxu0
  %272 = vmatprep.mubr.bf16.mxu0 0
  %273 = vmatmul.mubr.bf16.gmra.mrb[0].mxu0 %v178
  %v274 = vpop.f32.mrb[0].mxu0
  %v275 = vadd.f32 0.0, %v274
  %v276 = vpop.f32.mrb[0].mxu0
  %v277 = vpop.f32.mrb[0].mxu0
  %v278 = vadd.f32 0.0, %v277
  %v279 = vpop.f32.mrb[0].mxu0
  %280 = vmatprep.mubr.bf16.mxu0 0
  %281 = vmatmul.mubr.bf16.gmra.mrb[0].mxu0 %v181
  %v282 = vpop.f32.mrb[0].mxu0
  %v283 = vadd.f32 0.0, %v282
  %v284 = vpop.f32.mrb[0].mxu0
  %v285 = vpop.f32.mrb[0].mxu0
  %v286 = vadd.f32 0.0, %v285
  %v287 = vpop.f32.mrb[0].mxu0
  %288 = vmatprep.mubr.bf16.mxu0 0
  %289 = vmatmul.mubr.bf16.gmra.mrb[0].mxu0 %v184
  %v290 = vpop.f32.mrb[0].mxu0
  %v291 = vadd.f32 0.0, %v290
  %v292 = vpop.f32.mrb[0].mxu0
  %v293 = vpop.f32.mrb[0].mxu0
  %v294 = vadd.f32 0.0, %v293
  %v295 = vpop.f32.mrb[0].mxu0
  %296 = vmatprep.mubr.bf16.mxu0 0
  %297 = vmatmul.mubr.bf16.gmra.mrb[0].mxu0 %v187
  %v298 = vpop.f32.mrb[0].mxu0
  %v299 = vadd.f32 0.0, %v298
  %v300 = vpop.f32.mrb[0].mxu0
  %v301 = vpop.f32.mrb[0].mxu0
  %v302 = vadd.f32 0.0, %v301
  %v303 = vpop.f32.mrb[0].mxu0
  %304 = vmatprep.mubr.bf16.mxu0 0
  %305 = vmatmul.mubr.bf16.gmra.mrb[0].mxu0 %v190
  %v306 = vpop.f32.mrb[0].mxu0
  %v307 = vadd.f32 0.0, %v306
  %v308 = vpop.f32.mrb[0].mxu0
  %v309 = vpop.f32.mrb[0].mxu0
  %v310 = vadd.f32 0.0, %v309
  %v311 = vpop.f32.mrb[0].mxu0
  %312 = vmatprep.mubr.bf16.mxu0 0
  %313 = vmatmul.mubr.bf16.gmra.mrb[0].mxu0 %v193
  %v314 = vpop.f32.mrb[0].mxu0
  %v315 = vadd.f32 0.0, %v314
  %v316 = vpop.f32.mrb[0].mxu0
  %v317 = vpop.f32.mrb[0].mxu0
  %v318 = vadd.f32 0.0, %v317
  %v319 = vpop.f32.mrb[0].mxu0
  %320 = vmatprep.mubr.bf16.mxu0 0
  %321 = vmatmul.mubr.bf16.gmra.mrb[0].mxu0 %v196
  %v322 = vpop.f32.mrb[0].mxu0
  %v323 = vadd.f32 0.0, %v322
  %v324 = vpop.f32.mrb[0].mxu0
  %v325 = vpop.f32.mrb[0].mxu0
  %v326 = vadd.f32 0.0, %v325
  %v327 = vpop.f32.mrb[0].mxu0
  %328 = vmatprep.mubr.bf16.mxu0 0
  %329 = vmatmul.mubr.bf16.gmra.mrb[0].mxu0 %v199
  %v330 = vpop.f32.mrb[0].mxu0
  %v331 = vadd.f32 0.0, %v330
  %v332 = vpop.f32.mrb[0].mxu0
  %v333 = vpop.f32.mrb[0].mxu0
  %v334 = vadd.f32 0.0, %v333
  %v335 = vpop.f32.mrb[0].mxu0
  %336 = vmatprep.mubr.bf16.mxu0 0
  %337 = vmatmul.mubr.bf16.gmra.mrb[0].mxu0 %v202
  %v338 = vpop.f32.mrb[0].mxu0
  %v339 = vadd.f32 0.0, %v338
  %v340 = vpop.f32.mrb[0].mxu0
  %v341 = vpop.f32.mrb[0].mxu0
  %v342 = vadd.f32 0.0, %v341
  %v343 = vpop.f32.mrb[0].mxu0
  %344 = vmatprep.mubr.bf16.mxu0 0
  %345 = vmatmul.mubr.bf16.gmra.mrb[0].mxu0 %v205
  %v346 = vpop.f32.mrb[0].mxu0
  %v347 = vadd.f32 0.0, %v346
  %v348 = vpop.f32.mrb[0].mxu0
  %v349 = vpop.f32.mrb[0].mxu0
  %v350 = vadd.f32 0.0, %v349
  %v351 = vpop.f32.mrb[0].mxu0
  %352 = vmatprep.mubr.bf16.mxu0 0
  %353 = vmatmul.mubr.bf16.gmra.mrb[0].mxu0 %v208
  %v354 = vpop.f32.mrb[0].mxu0
  %v355 = vadd.f32 0.0, %v354
  %v356 = vpop.f32.mrb[0].mxu0
  %v357 = vpop.f32.mrb[0].mxu0
  %v358 = vadd.f32 0.0, %v357
  %v359 = vpop.f32.mrb[0].mxu0
  %360 = vmatprep.mubr.bf16.mxu0 0
  %361 = vmatmul.mubr.bf16.gmra.mrb[0].mxu0 %v211
  %v362 = vpop.f32.mrb[0].mxu0
  %v363 = vadd.f32 0.0, %v362
  %v364 = vpop.f32.mrb[0].mxu0
  %v365 = vpop.f32.mrb[0].mxu0
  %v366 = vadd.f32 0.0, %v365
  %v367 = vpop.f32.mrb[0].mxu0
  %368 = vmatprep.mubr.bf16.mxu0 0
  %369 = vmatmul.mubr.bf16.gmra.mrb[0].mxu0 %v214
  %v370 = vpop.f32.mrb[0].mxu0
  %v371 = vadd.f32 0.0, %v370
  %v372 = vpop.f32.mrb[0].mxu0
  %v373 = vpop.f32.mrb[0].mxu0
  %v374 = vadd.f32 0.0, %v373
  %v375 = vpop.f32.mrb[0].mxu0
  %376 = vdwg.mxu0
  %v393 = vunpack.c.l.b16 %v87
  %v394 = vunpack.c.l.b16 %v88
  %v395 = vunpack.c.l.b16 %v89
  %v396 = vunpack.c.l.b16 %v90
  %v397 = vunpack.c.l.b16 %v91
  %v398 = vunpack.c.l.b16 %v92
  %v399 = vunpack.c.l.b16 %v93
  %v400 = vunpack.c.l.b16 %v94
  %v401 = vunpack.c.l.b16 %v95
  %v402 = vunpack.c.l.b16 %v96
  %v403 = vunpack.c.l.b16 %v97
  %v404 = vunpack.c.l.b16 %v98
  %v405 = vunpack.c.l.b16 %v99
  %v406 = vunpack.c.l.b16 %v100
  %v407 = vunpack.c.l.b16 %v101
  %v408 = vunpack.c.l.b16 %v102
  %v409 = vpack.c.b16 %v394, %v393
  %v410 = vpack.c.b16 %v396, %v395
  %v411 = vpack.c.b16 %v398, %v397
  %v412 = vpack.c.b16 %v400, %v399
  %v413 = vpack.c.b16 %v402, %v401
  %v414 = vpack.c.b16 %v404, %v403
  %v415 = vpack.c.b16 %v406, %v405
  %v416 = vpack.c.b16 %v408, %v407
  %425 = vmatprep.subr.bf16.mxu0 0
  %426 = vmatpush1.bf16.msra.mxu0 %v409
  %427 = vmatprep.subr.bf16.mxu0 0
  %428 = vmatpush1.bf16.msra.mxu0 %v410
  %429 = vmatprep.subr.bf16.mxu0 0
  %430 = vmatpush1.bf16.msra.mxu0 %v411
  %431 = vmatprep.subr.bf16.mxu0 0
  %432 = vmatpush1.bf16.msra.mxu0 %v412
  %433 = vmatprep.subr.bf16.mxu0 0
  %434 = vmatpush1.bf16.msra.mxu0 %v413
  %435 = vmatprep.subr.bf16.mxu0 0
  %436 = vmatpush1.bf16.msra.mxu0 %v414
  %437 = vmatprep.subr.bf16.mxu0 0
  %438 = vmatpush1.bf16.msra.mxu0 %v415
  %439 = vmatprep.subr.bf16.mxu0 0
  %440 = vmatpush1.bf16.msra.mxu0 %v416
  %441 = vmatprep.subr.bf16.mxu0 0
  %442 = vmatpush1.bf16.msra.mxu0 0
  %443 = vmatprep.subr.bf16.mxu0 0
  %444 = vmatpush1.bf16.msra.mxu0 0
  %445 = vmatprep.subr.bf16.mxu0 0
  %446 = vmatpush1.bf16.msra.mxu0 0
  %447 = vmatprep.subr.bf16.mxu0 0
  %448 = vmatpush1.bf16.msra.mxu0 0
  %449 = vmatprep.subr.bf16.mxu0 0
  %450 = vmatpush1.bf16.msra.mxu0 0
  %451 = vmatprep.subr.bf16.mxu0 0
  %452 = vmatpush1.bf16.msra.mxu0 0
  %453 = vmatprep.subr.bf16.mxu0 0
  %454 = vmatpush1.bf16.msra.mxu0 0
  %455 = vmatprep.subr.bf16.mxu0 0
  %456 = vmatpush1.bf16.msra.mxu0 0
  %457 = vmatprep.mubr.bf16.mxu0 0
  %458 = vmatmul.mubr.bf16.gmra.mrb[0].mxu0 %v71
  %v459 = vpop.f32.mrb[0].mxu0
  %v460 = vadd.f32 %v251, %v459
  %v461 = vpop.f32.mrb[0].mxu0
  %v462 = vpop.f32.mrb[0].mxu0
  %v463 = vadd.f32 %v254, %v462
  %v464 = vpop.f32.mrb[0].mxu0
  %465 = vmatprep.mubr.bf16.mxu0 0
  %466 = vmatmul.mubr.bf16.gmra.mrb[0].mxu0 %v72
  %v467 = vpop.f32.mrb[0].mxu0
  %v468 = vadd.f32 %v259, %v467
  %v469 = vpop.f32.mrb[0].mxu0
  %v470 = vpop.f32.mrb[0].mxu0
  %v471 = vadd.f32 %v262, %v470
  %v472 = vpop.f32.mrb[0].mxu0
  %473 = vmatprep.mubr.bf16.mxu0 0
  %474 = vmatmul.mubr.bf16.gmra.mrb[0].mxu0 %v73
  %v475 = vpop.f32.mrb[0].mxu0
  %v476 = vadd.f32 %v267, %v475
  %v477 = vpop.f32.mrb[0].mxu0
  %v478 = vpop.f32.mrb[0].mxu0
  %v479 = vadd.f32 %v270, %v478
  %v480 = vpop.f32.mrb[0].mxu0
  %481 = vmatprep.mubr.bf16.mxu0 0
  %482 = vmatmul.mubr.bf16.gmra.mrb[0].mxu0 %v74
  %v483 = vpop.f32.mrb[0].mxu0
  %v484 = vadd.f32 %v275, %v483
  %v485 = vpop.f32.mrb[0].mxu0
  %v486 = vpop.f32.mrb[0].mxu0
  %v487 = vadd.f32 %v278, %v486
  %v488 = vpop.f32.mrb[0].mxu0
  %489 = vmatprep.mubr.bf16.mxu0 0
  %490 = vmatmul.mubr.bf16.gmra.mrb[0].mxu0 %v75
  %v491 = vpop.f32.mrb[0].mxu0
  %v492 = vadd.f32 %v283, %v491
  %v493 = vpop.f32.mrb[0].mxu0
  %v494 = vpop.f32.mrb[0].mxu0
  %v495 = vadd.f32 %v286, %v494
  %v496 = vpop.f32.mrb[0].mxu0
  %497 = vmatprep.mubr.bf16.mxu0 0
  %498 = vmatmul.mubr.bf16.gmra.mrb[0].mxu0 %v76
  %v499 = vpop.f32.mrb[0].mxu0
  %v500 = vadd.f32 %v291, %v499
  %v501 = vpop.f32.mrb[0].mxu0
  %v502 = vpop.f32.mrb[0].mxu0
  %v503 = vadd.f32 %v294, %v502
  %v504 = vpop.f32.mrb[0].mxu0
  %505 = vmatprep.mubr.bf16.mxu0 0
  %506 = vmatmul.mubr.bf16.gmra.mrb[0].mxu0 %v77
  %v507 = vpop.f32.mrb[0].mxu0
  %v508 = vadd.f32 %v299, %v507
  %v509 = vpop.f32.mrb[0].mxu0
  %v510 = vpop.f32.mrb[0].mxu0
  %v511 = vadd.f32 %v302, %v510
  %v512 = vpop.f32.mrb[0].mxu0
  %513 = vmatprep.mubr.bf16.mxu0 0
  %514 = vmatmul.mubr.bf16.gmra.mrb[0].mxu0 %v78
  %v515 = vpop.f32.mrb[0].mxu0
  %v516 = vadd.f32 %v307, %v515
  %v517 = vpop.f32.mrb[0].mxu0
  %v518 = vpop.f32.mrb[0].mxu0
  %v519 = vadd.f32 %v310, %v518
  %v520 = vpop.f32.mrb[0].mxu0
  %521 = vmatprep.mubr.bf16.mxu0 0
  %522 = vmatmul.mubr.bf16.gmra.mrb[0].mxu0 %v79
  %v523 = vpop.f32.mrb[0].mxu0
  %v524 = vadd.f32 %v315, %v523
  %v525 = vpop.f32.mrb[0].mxu0
  %v526 = vpop.f32.mrb[0].mxu0
  %v527 = vadd.f32 %v318, %v526
  %v528 = vpop.f32.mrb[0].mxu0
  %529 = vmatprep.mubr.bf16.mxu0 0
  %530 = vmatmul.mubr.bf16.gmra.mrb[0].mxu0 %v80
  %v531 = vpop.f32.mrb[0].mxu0
  %v532 = vadd.f32 %v323, %v531
  %v533 = vpop.f32.mrb[0].mxu0
  %v534 = vpop.f32.mrb[0].mxu0
  %v535 = vadd.f32 %v326, %v534
  %v536 = vpop.f32.mrb[0].mxu0
  %537 = vmatprep.mubr.bf16.mxu0 0
  %538 = vmatmul.mubr.bf16.gmra.mrb[0].mxu0 %v81
  %v539 = vpop.f32.mrb[0].mxu0
  %v540 = vadd.f32 %v331, %v539
  %v541 = vpop.f32.mrb[0].mxu0
  %v542 = vpop.f32.mrb[0].mxu0
  %v543 = vadd.f32 %v334, %v542
  %v544 = vpop.f32.mrb[0].mxu0
  %545 = vmatprep.mubr.bf16.mxu0 0
  %546 = vmatmul.mubr.bf16.gmra.mrb[0].mxu0 %v82
  %v547 = vpop.f32.mrb[0].mxu0
  %v548 = vadd.f32 %v339, %v547
  %v549 = vpop.f32.mrb[0].mxu0
  %v550 = vpop.f32.mrb[0].mxu0
  %v551 = vadd.f32 %v342, %v550
  %v552 = vpop.f32.mrb[0].mxu0
  %553 = vmatprep.mubr.bf16.mxu0 0
  %554 = vmatmul.mubr.bf16.gmra.mrb[0].mxu0 %v83
  %v555 = vpop.f32.mrb[0].mxu0
  %v556 = vadd.f32 %v347, %v555
  %v557 = vpop.f32.mrb[0].mxu0
  %v558 = vpop.f32.mrb[0].mxu0
  %v559 = vadd.f32 %v350, %v558
  %v560 = vpop.f32.mrb[0].mxu0
  %561 = vmatprep.mubr.bf16.mxu0 0
  %562 = vmatmul.mubr.bf16.gmra.mrb[0].mxu0 %v84
  %v563 = vpop.f32.mrb[0].mxu0
  %v564 = vadd.f32 %v355, %v563
  %v565 = vpop.f32.mrb[0].mxu0
  %v566 = vpop.f32.mrb[0].mxu0
  %v567 = vadd.f32 %v358, %v566
  %v568 = vpop.f32.mrb[0].mxu0
  %569 = vmatprep.mubr.bf16.mxu0 0
  %570 = vmatmul.mubr.bf16.gmra.mrb[0].mxu0 %v85
  %v571 = vpop.f32.mrb[0].mxu0
  %v572 = vadd.f32 %v363, %v571
  %v573 = vpop.f32.mrb[0].mxu0
  %v574 = vpop.f32.mrb[0].mxu0
  %v575 = vadd.f32 %v366, %v574
  %v576 = vpop.f32.mrb[0].mxu0
  %577 = vmatprep.mubr.bf16.mxu0 0
  %578 = vmatmul.mubr.bf16.gmra.mrb[0].mxu0 %v86
  %v579 = vpop.f32.mrb[0].mxu0
  %v580 = vadd.f32 %v371, %v579
  %v581 = vpop.f32.mrb[0].mxu0
  %v582 = vpop.f32.mrb[0].mxu0
  %v583 = vadd.f32 %v374, %v582
  %v584 = vpop.f32.mrb[0].mxu0
  %585 = vdwg.mxu0
  %v586 = vld [vmem:[%s2] sm:$0xff]
  %v587 = vld [vmem:[%s2 + $0x8] sm:$0xff]
  %v588 = vld [vmem:[%s2 + $0x10] sm:$0xff]
  %v589 = vld [vmem:[%s2 + $0x18] sm:$0xff]
  %v590 = vld [vmem:[%s2 + $0x20] sm:$0xff]
  %v591 = vld [vmem:[%s2 + $0x28] sm:$0xff]
  %v592 = vld [vmem:[%s2 + $0x30] sm:$0xff]
  %v593 = vld [vmem:[%s2 + $0x38] sm:$0xff]
  %v594 = vld [vmem:[%s2 + $0x40] sm:$0xff]
  %v595 = vld [vmem:[%s2 + $0x48] sm:$0xff]
  %v596 = vld [vmem:[%s2 + $0x50] sm:$0xff]
  %v597 = vld [vmem:[%s2 + $0x58] sm:$0xff]
  %v598 = vld [vmem:[%s2 + $0x60] sm:$0xff]
  %v599 = vld [vmem:[%s2 + $0x68] sm:$0xff]
  %v600 = vld [vmem:[%s2 + $0x70] sm:$0xff]
  %v601 = vld [vmem:[%s2 + $0x78] sm:$0xff]
  %v602 = vld [vmem:[%s2 + $0x80] sm:$0xff]
  %v603 = vld [vmem:[%s2 + $0x88] sm:$0xff]
  %v604 = vld [vmem:[%s2 + $0x90] sm:$0xff]
  %v605 = vld [vmem:[%s2 + $0x98] sm:$0xff]
  %v606 = vld [vmem:[%s2 + $0xa0] sm:$0xff]
  %v607 = vld [vmem:[%s2 + $0xa8] sm:$0xff]
  %v608 = vld [vmem:[%s2 + $0xb0] sm:$0xff]
  %v609 = vld [vmem:[%s2 + $0xb8] sm:$0xff]
  %v610 = vld [vmem:[%s2 + $0xc0] sm:$0xff]
  %v611 = vld [vmem:[%s2 + $0xc8] sm:$0xff]
  %v612 = vld [vmem:[%s2 + $0xd0] sm:$0xff]
  %v613 = vld [vmem:[%s2 + $0xd8] sm:$0xff]
  %v614 = vld [vmem:[%s2 + $0xe0] sm:$0xff]
  %v615 = vld [vmem:[%s2 + $0xe8] sm:$0xff]
  %v616 = vld [vmem:[%s2 + $0xf0] sm:$0xff]
  %v617 = vld [vmem:[%s2 + $0xf8] sm:$0xff]
  %v618 = vpack.c.bf16 %v587, %v586
  %v619 = vpack.c.bf16 %v589, %v588
  %v620 = vpack.c.bf16 %v591, %v590
  %v621 = vpack.c.bf16 %v593, %v592
  %v622 = vpack.c.bf16 %v595, %v594
  %v623 = vpack.c.bf16 %v597, %v596
  %v624 = vpack.c.bf16 %v599, %v598
  %v625 = vpack.c.bf16 %v601, %v600
  %v626 = vpack.c.bf16 %v603, %v602
  %v627 = vpack.c.bf16 %v605, %v604
  %v628 = vpack.c.bf16 %v607, %v606
  %v629 = vpack.c.bf16 %v609, %v608
  %v630 = vpack.c.bf16 %v611, %v610
  %v631 = vpack.c.bf16 %v613, %v612
  %v632 = vpack.c.bf16 %v615, %v614
  %v633 = vpack.c.bf16 %v617, %v616
  %v634 = vld [vmem:[%s5] sm:$0xf]
  %v635 = vld [vmem:[%s5 + $0x4] sm:$0xf]
  %v636 = vld [vmem:[%s5 + $0x8] sm:$0xf]
  %v637 = vld [vmem:[%s5 + $0xc] sm:$0xf]
  %v642 = vunpack.c.l.b16 %v634
  %v643 = vunpack.c.l.b16 %v635
  %v644 = vunpack.c.l.b16 %v636
  %v645 = vunpack.c.l.b16 %v637
  %v646 = vpack.c.b16 %v643, %v642
  %v647 = vpack.c.b16 %v645, %v644
  %v651 = vsel %vm167, %v618, 0
  %v654 = vsel %vm167, %v619, 0
  %v657 = vsel %vm167, %v620, 0
  %v660 = vsel %vm167, %v621, 0
  %v663 = vsel %vm167, %v622, 0
  %v666 = vsel %vm167, %v623, 0
  %v669 = vsel %vm167, %v624, 0
  %v672 = vsel %vm167, %v625, 0
  %v675 = vsel %vm167, %v626, 0
  %v678 = vsel %vm167, %v627, 0
  %v681 = vsel %vm167, %v628, 0
  %v684 = vsel %vm167, %v629, 0
  %v687 = vsel %vm167, %v630, 0
  %v690 = vsel %vm167, %v631, 0
  %v693 = vsel %vm167, %v632, 0
  %v696 = vsel %vm167, %v633, 0
  %698 = vmatprep.subr.bf16.mxu0 0
  %699 = vmatpush1.bf16.msra.mxu0 %v646
  %700 = vmatprep.subr.bf16.mxu0 0
  %701 = vmatpush1.bf16.msra.mxu0 %v647
  %702 = vmatprep.subr.bf16.mxu0 0
  %703 = vmatpush1.bf16.msra.mxu0 0
  %704 = vmatprep.subr.bf16.mxu0 0
  %705 = vmatpush1.bf16.msra.mxu0 0
  %706 = vmatprep.subr.bf16.mxu0 0
  %707 = vmatpush1.bf16.msra.mxu0 0
  %708 = vmatprep.subr.bf16.mxu0 0
  %709 = vmatpush1.bf16.msra.mxu0 0
  %710 = vmatprep.subr.bf16.mxu0 0
  %711 = vmatpush1.bf16.msra.mxu0 0
  %712 = vmatprep.subr.bf16.mxu0 0
  %713 = vmatpush1.bf16.msra.mxu0 0
  %714 = vmatprep.subr.bf16.mxu0 0
  %715 = vmatpush1.bf16.msra.mxu0 0
  %716 = vmatprep.subr.bf16.mxu0 0
  %717 = vmatpush1.bf16.msra.mxu0 0
  %718 = vmatprep.subr.bf16.mxu0 0
  %719 = vmatpush1.bf16.msra.mxu0 0
  %720 = vmatprep.subr.bf16.mxu0 0
  %721 = vmatpush1.bf16.msra.mxu0 0
  %722 = vmatprep.subr.bf16.mxu0 0
  %723 = vmatpush1.bf16.msra.mxu0 0
  %724 = vmatprep.subr.bf16.mxu0 0
  %725 = vmatpush1.bf16.msra.mxu0 0
  %726 = vmatprep.subr.bf16.mxu0 0
  %727 = vmatpush1.bf16.msra.mxu0 0
  %728 = vmatprep.subr.bf16.mxu0 0
  %729 = vmatpush1.bf16.msra.mxu0 0
  %730 = vmatprep.mubr.bf16.mxu0 0
  %731 = vmatmul.mubr.bf16.gmra.mrb[0].mxu0 %v651
  %v732 = vpop.f32.mrb[0].mxu0
  %v733 = vadd.f32 0.0, %v732
  %v734 = vpop.f32.mrb[0].mxu0
  %v735 = vpop.f32.mrb[0].mxu0
  %v736 = vadd.f32 0.0, %v735
  %v737 = vpop.f32.mrb[0].mxu0
  %738 = vmatprep.mubr.bf16.mxu0 0
  %739 = vmatmul.mubr.bf16.gmra.mrb[0].mxu0 %v654
  %v740 = vpop.f32.mrb[0].mxu0
  %v741 = vadd.f32 0.0, %v740
  %v742 = vpop.f32.mrb[0].mxu0
  %v743 = vpop.f32.mrb[0].mxu0
  %v744 = vadd.f32 0.0, %v743
  %v745 = vpop.f32.mrb[0].mxu0
  %746 = vmatprep.mubr.bf16.mxu0 0
  %747 = vmatmul.mubr.bf16.gmra.mrb[0].mxu0 %v657
  %v748 = vpop.f32.mrb[0].mxu0
  %v749 = vadd.f32 0.0, %v748
  %v750 = vpop.f32.mrb[0].mxu0
  %v751 = vpop.f32.mrb[0].mxu0
  %v752 = vadd.f32 0.0, %v751
  %v753 = vpop.f32.mrb[0].mxu0
  %754 = vmatprep.mubr.bf16.mxu0 0
  %755 = vmatmul.mubr.bf16.gmra.mrb[0].mxu0 %v660
  %v756 = vpop.f32.mrb[0].mxu0
  %v757 = vadd.f32 0.0, %v756
  %v758 = vpop.f32.mrb[0].mxu0
  %v759 = vpop.f32.mrb[0].mxu0
  %v760 = vadd.f32 0.0, %v759
  %v761 = vpop.f32.mrb[0].mxu0
  %762 = vmatprep.mubr.bf16.mxu0 0
  %763 = vmatmul.mubr.bf16.gmra.mrb[0].mxu0 %v663
  %v764 = vpop.f32.mrb[0].mxu0
  %v765 = vadd.f32 0.0, %v764
  %v766 = vpop.f32.mrb[0].mxu0
  %v767 = vpop.f32.mrb[0].mxu0
  %v768 = vadd.f32 0.0, %v767
  %v769 = vpop.f32.mrb[0].mxu0
  %770 = vmatprep.mubr.bf16.mxu0 0
  %771 = vmatmul.mubr.bf16.gmra.mrb[0].mxu0 %v666
  %v772 = vpop.f32.mrb[0].mxu0
  %v773 = vadd.f32 0.0, %v772
  %v774 = vpop.f32.mrb[0].mxu0
  %v775 = vpop.f32.mrb[0].mxu0
  %v776 = vadd.f32 0.0, %v775
  %v777 = vpop.f32.mrb[0].mxu0
  %778 = vmatprep.mubr.bf16.mxu0 0
  %779 = vmatmul.mubr.bf16.gmra.mrb[0].mxu0 %v669
  %v780 = vpop.f32.mrb[0].mxu0
  %v781 = vadd.f32 0.0, %v780
  %v782 = vpop.f32.mrb[0].mxu0
  %v783 = vpop.f32.mrb[0].mxu0
  %v784 = vadd.f32 0.0, %v783
  %v785 = vpop.f32.mrb[0].mxu0
  %786 = vmatprep.mubr.bf16.mxu0 0
  %787 = vmatmul.mubr.bf16.gmra.mrb[0].mxu0 %v672
  %v788 = vpop.f32.mrb[0].mxu0
  %v789 = vadd.f32 0.0, %v788
  %v790 = vpop.f32.mrb[0].mxu0
  %v791 = vpop.f32.mrb[0].mxu0
  %v792 = vadd.f32 0.0, %v791
  %v793 = vpop.f32.mrb[0].mxu0
  %794 = vmatprep.mubr.bf16.mxu0 0
  %795 = vmatmul.mubr.bf16.gmra.mrb[0].mxu0 %v675
  %v796 = vpop.f32.mrb[0].mxu0
  %v797 = vadd.f32 0.0, %v796
  %v798 = vpop.f32.mrb[0].mxu0
  %v799 = vpop.f32.mrb[0].mxu0
  %v800 = vadd.f32 0.0, %v799
  %v801 = vpop.f32.mrb[0].mxu0
  %802 = vmatprep.mubr.bf16.mxu0 0
  %803 = vmatmul.mubr.bf16.gmra.mrb[0].mxu0 %v678
  %v804 = vpop.f32.mrb[0].mxu0
  %v805 = vadd.f32 0.0, %v804
  %v806 = vpop.f32.mrb[0].mxu0
  %v807 = vpop.f32.mrb[0].mxu0
  %v808 = vadd.f32 0.0, %v807
  %v809 = vpop.f32.mrb[0].mxu0
  %810 = vmatprep.mubr.bf16.mxu0 0
  %811 = vmatmul.mubr.bf16.gmra.mrb[0].mxu0 %v681
  %v812 = vpop.f32.mrb[0].mxu0
  %v813 = vadd.f32 0.0, %v812
  %v814 = vpop.f32.mrb[0].mxu0
  %v815 = vpop.f32.mrb[0].mxu0
  %v816 = vadd.f32 0.0, %v815
  %v817 = vpop.f32.mrb[0].mxu0
  %818 = vmatprep.mubr.bf16.mxu0 0
  %819 = vmatmul.mubr.bf16.gmra.mrb[0].mxu0 %v684
  %v820 = vpop.f32.mrb[0].mxu0
  %v821 = vadd.f32 0.0, %v820
  %v822 = vpop.f32.mrb[0].mxu0
  %v823 = vpop.f32.mrb[0].mxu0
  %v824 = vadd.f32 0.0, %v823
  %v825 = vpop.f32.mrb[0].mxu0
  %826 = vmatprep.mubr.bf16.mxu0 0
  %827 = vmatmul.mubr.bf16.gmra.mrb[0].mxu0 %v687
  %v828 = vpop.f32.mrb[0].mxu0
  %v829 = vadd.f32 0.0, %v828
  %v830 = vpop.f32.mrb[0].mxu0
  %v831 = vpop.f32.mrb[0].mxu0
  %v832 = vadd.f32 0.0, %v831
  %v833 = vpop.f32.mrb[0].mxu0
  %834 = vmatprep.mubr.bf16.mxu0 0
  %835 = vmatmul.mubr.bf16.gmra.mrb[0].mxu0 %v690
  %v836 = vpop.f32.mrb[0].mxu0
  %v837 = vadd.f32 0.0, %v836
  %v838 = vpop.f32.mrb[0].mxu0
  %v839 = vpop.f32.mrb[0].mxu0
  %v840 = vadd.f32 0.0, %v839
  %v841 = vpop.f32.mrb[0].mxu0
  %842 = vmatprep.mubr.bf16.mxu0 0
  %843 = vmatmul.mubr.bf16.gmra.mrb[0].mxu0 %v693
  %v844 = vpop.f32.mrb[0].mxu0
  %v845 = vadd.f32 0.0, %v844
  %v846 = vpop.f32.mrb[0].mxu0
  %v847 = vpop.f32.mrb[0].mxu0
  %v848 = vadd.f32 0.0, %v847
  %v849 = vpop.f32.mrb[0].mxu0
  %850 = vmatprep.mubr.bf16.mxu0 0
  %851 = vmatmul.mubr.bf16.gmra.mrb[0].mxu0 %v696
  %v852 = vpop.f32.mrb[0].mxu0
  %v853 = vadd.f32 0.0, %v852
  %v854 = vpop.f32.mrb[0].mxu0
  %v855 = vpop.f32.mrb[0].mxu0
  %v856 = vadd.f32 0.0, %v855
  %v857 = vpop.f32.mrb[0].mxu0
  %858 = vdwg.mxu0
  %v859 = vadd.f32 %v460, %v733
  %v860 = vadd.f32 %v463, %v736
  %v861 = vadd.f32 %v468, %v741
  %v862 = vadd.f32 %v471, %v744
  %v863 = vadd.f32 %v476, %v749
  %v864 = vadd.f32 %v479, %v752
  %v865 = vadd.f32 %v484, %v757
  %v866 = vadd.f32 %v487, %v760
  %v867 = vadd.f32 %v492, %v765
  %v868 = vadd.f32 %v495, %v768
  %v869 = vadd.f32 %v500, %v773
  %v870 = vadd.f32 %v503, %v776
  %v871 = vadd.f32 %v508, %v781
  %v872 = vadd.f32 %v511, %v784
  %v873 = vadd.f32 %v516, %v789
  %v874 = vadd.f32 %v519, %v792
  %v875 = vadd.f32 %v524, %v797
  %v876 = vadd.f32 %v527, %v800
  %v877 = vadd.f32 %v532, %v805
  %v878 = vadd.f32 %v535, %v808
  %v879 = vadd.f32 %v540, %v813
  %v880 = vadd.f32 %v543, %v816
  %v881 = vadd.f32 %v548, %v821
  %v882 = vadd.f32 %v551, %v824
  %v883 = vadd.f32 %v556, %v829
  %v884 = vadd.f32 %v559, %v832
  %v885 = vadd.f32 %v564, %v837
  %v886 = vadd.f32 %v567, %v840
  %v887 = vadd.f32 %v572, %v845
  %v888 = vadd.f32 %v575, %v848
  %v889 = vadd.f32 %v580, %v853
  %v890 = vadd.f32 %v583, %v856
  %v891 = vld [vmem:[%s6] sm:$0x1]
  %v893 = vlaneseq
  %v894 = vshrl.u32 %v893, 7
  %v895 = vsub.s32 0, %v894
  %v896 = vrot.slane %v891, %v895
  %v898 = vadd.f32 %v859, %v896
  %v899 = vadd.f32 %v860, %v896
  %v900 = vadd.f32 %v861, %v896
  %v901 = vadd.f32 %v862, %v896
  %v902 = vadd.f32 %v863, %v896
  %v903 = vadd.f32 %v864, %v896
  %v904 = vadd.f32 %v865, %v896
  %v905 = vadd.f32 %v866, %v896
  %v906 = vadd.f32 %v867, %v896
  %v907 = vadd.f32 %v868, %v896
  %v908 = vadd.f32 %v869, %v896
  %v909 = vadd.f32 %v870, %v896
  %v910 = vadd.f32 %v871, %v896
  %v911 = vadd.f32 %v872, %v896
  %v912 = vadd.f32 %v873, %v896
  %v913 = vadd.f32 %v874, %v896
  %v914 = vadd.f32 %v875, %v896
  %v915 = vadd.f32 %v876, %v896
  %v916 = vadd.f32 %v877, %v896
  %v917 = vadd.f32 %v878, %v896
  %v918 = vadd.f32 %v879, %v896
  %v919 = vadd.f32 %v880, %v896
  %v920 = vadd.f32 %v881, %v896
  %v921 = vadd.f32 %v882, %v896
  %v922 = vadd.f32 %v883, %v896
  %v923 = vadd.f32 %v884, %v896
  %v924 = vadd.f32 %v885, %v896
  %v925 = vadd.f32 %v886, %v896
  %v926 = vadd.f32 %v887, %v896
  %v927 = vadd.f32 %v888, %v896
  %v928 = vadd.f32 %v889, %v896
  %v929 = vadd.f32 %v890, %v896
  %v930 = vmax.f32 %v898, 0.0
  %v931 = vmax.f32 %v899, 0.0
  %v932 = vmax.f32 %v900, 0.0
  %v933 = vmax.f32 %v901, 0.0
  %v934 = vmax.f32 %v902, 0.0
  %v935 = vmax.f32 %v903, 0.0
  %v936 = vmax.f32 %v904, 0.0
  %v937 = vmax.f32 %v905, 0.0
  %v938 = vmax.f32 %v906, 0.0
  %v939 = vmax.f32 %v907, 0.0
  %v940 = vmax.f32 %v908, 0.0
  %v941 = vmax.f32 %v909, 0.0
  %v942 = vmax.f32 %v910, 0.0
  %v943 = vmax.f32 %v911, 0.0
  %v944 = vmax.f32 %v912, 0.0
  %v945 = vmax.f32 %v913, 0.0
  %v946 = vmax.f32 %v914, 0.0
  %v947 = vmax.f32 %v915, 0.0
  %v948 = vmax.f32 %v916, 0.0
  %v949 = vmax.f32 %v917, 0.0
  %v950 = vmax.f32 %v918, 0.0
  %v951 = vmax.f32 %v919, 0.0
  %v952 = vmax.f32 %v920, 0.0
  %v953 = vmax.f32 %v921, 0.0
  %v954 = vmax.f32 %v922, 0.0
  %v955 = vmax.f32 %v923, 0.0
  %v956 = vmax.f32 %v924, 0.0
  %v957 = vmax.f32 %v925, 0.0
  %v958 = vmax.f32 %v926, 0.0
  %v959 = vmax.f32 %v927, 0.0
  %v960 = vmax.f32 %v928, 0.0
  %v961 = vmax.f32 %v929, 0.0
  %v962 = vpack.c.bf16 %v931, %v930
  %v963 = vpack.c.bf16 %v933, %v932
  %v964 = vpack.c.bf16 %v935, %v934
  %v965 = vpack.c.bf16 %v937, %v936
  %v966 = vpack.c.bf16 %v939, %v938
  %v967 = vpack.c.bf16 %v941, %v940
  %v968 = vpack.c.bf16 %v943, %v942
  %v969 = vpack.c.bf16 %v945, %v944
  %v970 = vpack.c.bf16 %v947, %v946
  %v971 = vpack.c.bf16 %v949, %v948
  %v972 = vpack.c.bf16 %v951, %v950
  %v973 = vpack.c.bf16 %v953, %v952
  %v974 = vpack.c.bf16 %v955, %v954
  %v975 = vpack.c.bf16 %v957, %v956
  %v976 = vpack.c.bf16 %v959, %v958
  %v977 = vpack.c.bf16 %v961, %v960
  %v978 = vld [vmem:[%s7] sm:$0xf]
  %v979 = vld [vmem:[%s7 + $0x4] sm:$0xf]
  %v980 = vld [vmem:[%s7 + $0x8] sm:$0xf]
  %v981 = vld [vmem:[%s7 + $0xc] sm:$0xf]
  %v982 = vld [vmem:[%s7 + $0x10] sm:$0xf]
  %v983 = vld [vmem:[%s7 + $0x14] sm:$0xf]
  %v984 = vld [vmem:[%s7 + $0x18] sm:$0xf]
  %v985 = vld [vmem:[%s7 + $0x1c] sm:$0xf]
  %v986 = vld [vmem:[%s8] sm:$0x1]
  %v988 = vlaneseq
  %v989 = vshrl.u32 %v988, 7
  %v990 = vsub.s32 0, %v989
  %v991 = vrot.slane %v986, %v990
  %v1001 = vunpack.c.l.b16 %v978
  %v1002 = vunpack.c.l.b16 %v979
  %v1003 = vunpack.c.l.b16 %v980
  %v1004 = vunpack.c.l.b16 %v981
  %v1005 = vunpack.c.l.b16 %v982
  %v1006 = vunpack.c.l.b16 %v983
  %v1007 = vunpack.c.l.b16 %v984
  %v1008 = vunpack.c.l.b16 %v985
  %v1009 = vpack.c.b16 %v1002, %v1001
  %v1010 = vpack.c.b16 %v1004, %v1003
  %v1011 = vpack.c.b16 %v1006, %v1005
  %v1012 = vpack.c.b16 %v1008, %v1007
  %vm1017 = vcmask 523264
  %v1019 = vsel %vm1017, %v962, 0
  %v1022 = vsel %vm1017, %v963, 0
  %v1025 = vsel %vm1017, %v964, 0
  %v1028 = vsel %vm1017, %v965, 0
  %v1031 = vsel %vm1017, %v966, 0
  %v1034 = vsel %vm1017, %v967, 0
  %v1037 = vsel %vm1017, %v968, 0
  %v1040 = vsel %vm1017, %v969, 0
  %v1043 = vsel %vm1017, %v970, 0
  %v1046 = vsel %vm1017, %v971, 0
  %v1049 = vsel %vm1017, %v972, 0
  %v1052 = vsel %vm1017, %v973, 0
  %v1055 = vsel %vm1017, %v974, 0
  %v1058 = vsel %vm1017, %v975, 0
  %v1061 = vsel %vm1017, %v976, 0
  %v1064 = vsel %vm1017, %v977, 0
  %1066 = vmatprep.subr.bf16.mxu0 0
  %1067 = vmatpush1.bf16.msra.mxu0 %v1009
  %1068 = vmatprep.subr.bf16.mxu0 0
  %1069 = vmatpush1.bf16.msra.mxu0 %v1010
  %1070 = vmatprep.subr.bf16.mxu0 0
  %1071 = vmatpush1.bf16.msra.mxu0 %v1011
  %1072 = vmatprep.subr.bf16.mxu0 0
  %1073 = vmatpush1.bf16.msra.mxu0 %v1012
  %1074 = vmatprep.subr.bf16.mxu0 0
  %1075 = vmatpush1.bf16.msra.mxu0 0
  %1076 = vmatprep.subr.bf16.mxu0 0
  %1077 = vmatpush1.bf16.msra.mxu0 0
  %1078 = vmatprep.subr.bf16.mxu0 0
  %1079 = vmatpush1.bf16.msra.mxu0 0
  %1080 = vmatprep.subr.bf16.mxu0 0
  %1081 = vmatpush1.bf16.msra.mxu0 0
  %1082 = vmatprep.subr.bf16.mxu0 0
  %1083 = vmatpush1.bf16.msra.mxu0 0
  %1084 = vmatprep.subr.bf16.mxu0 0
  %1085 = vmatpush1.bf16.msra.mxu0 0
  %1086 = vmatprep.subr.bf16.mxu0 0
  %1087 = vmatpush1.bf16.msra.mxu0 0
  %1088 = vmatprep.subr.bf16.mxu0 0
  %1089 = vmatpush1.bf16.msra.mxu0 0
  %1090 = vmatprep.subr.bf16.mxu0 0
  %1091 = vmatpush1.bf16.msra.mxu0 0
  %1092 = vmatprep.subr.bf16.mxu0 0
  %1093 = vmatpush1.bf16.msra.mxu0 0
  %1094 = vmatprep.subr.bf16.mxu0 0
  %1095 = vmatpush1.bf16.msra.mxu0 0
  %1096 = vmatprep.subr.bf16.mxu0 0
  %1097 = vmatpush1.bf16.msra.mxu0 0
  %1098 = vmatprep.mubr.bf16.mxu0 0
  %1099 = vmatmul.mubr.bf16.gmra.mrb[0].mxu0 %v1019
  %v1100 = vpop.f32.mrb[0].mxu0
  %v1101 = vadd.f32 %v991, %v1100
  %v1102 = vpop.f32.mrb[0].mxu0
  %v1103 = vpop.f32.mrb[0].mxu0
  %v1104 = vadd.f32 %v991, %v1103
  %v1105 = vpop.f32.mrb[0].mxu0
  %1106 = vmatprep.mubr.bf16.mxu0 0
  %1107 = vmatmul.mubr.bf16.gmra.mrb[0].mxu0 %v1022
  %v1108 = vpop.f32.mrb[0].mxu0
  %v1109 = vadd.f32 %v991, %v1108
  %v1110 = vpop.f32.mrb[0].mxu0
  %v1111 = vpop.f32.mrb[0].mxu0
  %v1112 = vadd.f32 %v991, %v1111
  %v1113 = vpop.f32.mrb[0].mxu0
  %1114 = vmatprep.mubr.bf16.mxu0 0
  %1115 = vmatmul.mubr.bf16.gmra.mrb[0].mxu0 %v1025
  %v1116 = vpop.f32.mrb[0].mxu0
  %v1117 = vadd.f32 %v991, %v1116
  %v1118 = vpop.f32.mrb[0].mxu0
  %v1119 = vpop.f32.mrb[0].mxu0
  %v1120 = vadd.f32 %v991, %v1119
  %v1121 = vpop.f32.mrb[0].mxu0
  %1122 = vmatprep.mubr.bf16.mxu0 0
  %1123 = vmatmul.mubr.bf16.gmra.mrb[0].mxu0 %v1028
  %v1124 = vpop.f32.mrb[0].mxu0
  %v1125 = vadd.f32 %v991, %v1124
  %v1126 = vpop.f32.mrb[0].mxu0
  %v1127 = vpop.f32.mrb[0].mxu0
  %v1128 = vadd.f32 %v991, %v1127
  %v1129 = vpop.f32.mrb[0].mxu0
  %1130 = vmatprep.mubr.bf16.mxu0 0
  %1131 = vmatmul.mubr.bf16.gmra.mrb[0].mxu0 %v1031
  %v1132 = vpop.f32.mrb[0].mxu0
  %v1133 = vadd.f32 %v991, %v1132
  %v1134 = vpop.f32.mrb[0].mxu0
  %v1135 = vpop.f32.mrb[0].mxu0
  %v1136 = vadd.f32 %v991, %v1135
  %v1137 = vpop.f32.mrb[0].mxu0
  %1138 = vmatprep.mubr.bf16.mxu0 0
  %1139 = vmatmul.mubr.bf16.gmra.mrb[0].mxu0 %v1034
  %v1140 = vpop.f32.mrb[0].mxu0
  %v1141 = vadd.f32 %v991, %v1140
  %v1142 = vpop.f32.mrb[0].mxu0
  %v1143 = vpop.f32.mrb[0].mxu0
  %v1144 = vadd.f32 %v991, %v1143
  %v1145 = vpop.f32.mrb[0].mxu0
  %1146 = vmatprep.mubr.bf16.mxu0 0
  %1147 = vmatmul.mubr.bf16.gmra.mrb[0].mxu0 %v1037
  %v1148 = vpop.f32.mrb[0].mxu0
  %v1149 = vadd.f32 %v991, %v1148
  %v1150 = vpop.f32.mrb[0].mxu0
  %v1151 = vpop.f32.mrb[0].mxu0
  %v1152 = vadd.f32 %v991, %v1151
  %v1153 = vpop.f32.mrb[0].mxu0
  %1154 = vmatprep.mubr.bf16.mxu0 0
  %1155 = vmatmul.mubr.bf16.gmra.mrb[0].mxu0 %v1040
  %v1156 = vpop.f32.mrb[0].mxu0
  %v1157 = vadd.f32 %v991, %v1156
  %v1158 = vpop.f32.mrb[0].mxu0
  %v1159 = vpop.f32.mrb[0].mxu0
  %v1160 = vadd.f32 %v991, %v1159
  %v1161 = vpop.f32.mrb[0].mxu0
  %1162 = vmatprep.mubr.bf16.mxu0 0
  %1163 = vmatmul.mubr.bf16.gmra.mrb[0].mxu0 %v1043
  %v1164 = vpop.f32.mrb[0].mxu0
  %v1165 = vadd.f32 %v991, %v1164
  %v1166 = vpop.f32.mrb[0].mxu0
  %v1167 = vpop.f32.mrb[0].mxu0
  %v1168 = vadd.f32 %v991, %v1167
  %v1169 = vpop.f32.mrb[0].mxu0
  %1170 = vmatprep.mubr.bf16.mxu0 0
  %1171 = vmatmul.mubr.bf16.gmra.mrb[0].mxu0 %v1046
  %v1172 = vpop.f32.mrb[0].mxu0
  %v1173 = vadd.f32 %v991, %v1172
  %v1174 = vpop.f32.mrb[0].mxu0
  %v1175 = vpop.f32.mrb[0].mxu0
  %v1176 = vadd.f32 %v991, %v1175
  %v1177 = vpop.f32.mrb[0].mxu0
  %1178 = vmatprep.mubr.bf16.mxu0 0
  %1179 = vmatmul.mubr.bf16.gmra.mrb[0].mxu0 %v1049
  %v1180 = vpop.f32.mrb[0].mxu0
  %v1181 = vadd.f32 %v991, %v1180
  %v1182 = vpop.f32.mrb[0].mxu0
  %v1183 = vpop.f32.mrb[0].mxu0
  %v1184 = vadd.f32 %v991, %v1183
  %v1185 = vpop.f32.mrb[0].mxu0
  %1186 = vmatprep.mubr.bf16.mxu0 0
  %1187 = vmatmul.mubr.bf16.gmra.mrb[0].mxu0 %v1052
  %v1188 = vpop.f32.mrb[0].mxu0
  %v1189 = vadd.f32 %v991, %v1188
  %v1190 = vpop.f32.mrb[0].mxu0
  %v1191 = vpop.f32.mrb[0].mxu0
  %v1192 = vadd.f32 %v991, %v1191
  %v1193 = vpop.f32.mrb[0].mxu0
  %1194 = vmatprep.mubr.bf16.mxu0 0
  %1195 = vmatmul.mubr.bf16.gmra.mrb[0].mxu0 %v1055
  %v1196 = vpop.f32.mrb[0].mxu0
  %v1197 = vadd.f32 %v991, %v1196
  %v1198 = vpop.f32.mrb[0].mxu0
  %v1199 = vpop.f32.mrb[0].mxu0
  %v1200 = vadd.f32 %v991, %v1199
  %v1201 = vpop.f32.mrb[0].mxu0
  %1202 = vmatprep.mubr.bf16.mxu0 0
  %1203 = vmatmul.mubr.bf16.gmra.mrb[0].mxu0 %v1058
  %v1204 = vpop.f32.mrb[0].mxu0
  %v1205 = vadd.f32 %v991, %v1204
  %v1206 = vpop.f32.mrb[0].mxu0
  %v1207 = vpop.f32.mrb[0].mxu0
  %v1208 = vadd.f32 %v991, %v1207
  %v1209 = vpop.f32.mrb[0].mxu0
  %1210 = vmatprep.mubr.bf16.mxu0 0
  %1211 = vmatmul.mubr.bf16.gmra.mrb[0].mxu0 %v1061
  %v1212 = vpop.f32.mrb[0].mxu0
  %v1213 = vadd.f32 %v991, %v1212
  %v1214 = vpop.f32.mrb[0].mxu0
  %v1215 = vpop.f32.mrb[0].mxu0
  %v1216 = vadd.f32 %v991, %v1215
  %v1217 = vpop.f32.mrb[0].mxu0
  %1218 = vmatprep.mubr.bf16.mxu0 0
  %1219 = vmatmul.mubr.bf16.gmra.mrb[0].mxu0 %v1064
  %v1220 = vpop.f32.mrb[0].mxu0
  %v1221 = vadd.f32 %v991, %v1220
  %v1222 = vpop.f32.mrb[0].mxu0
  %v1223 = vpop.f32.mrb[0].mxu0
  %v1224 = vadd.f32 %v991, %v1223
  %v1225 = vpop.f32.mrb[0].mxu0
  %1226 = vdwg.mxu0
  %v1227 = vmax.f32 %v1101, 0.0
  %v1228 = vmax.f32 %v1104, 0.0
  %v1229 = vmax.f32 %v1109, 0.0
  %v1230 = vmax.f32 %v1112, 0.0
  %v1231 = vmax.f32 %v1117, 0.0
  %v1232 = vmax.f32 %v1120, 0.0
  %v1233 = vmax.f32 %v1125, 0.0
  %v1234 = vmax.f32 %v1128, 0.0
  %v1235 = vmax.f32 %v1133, 0.0
  %v1236 = vmax.f32 %v1136, 0.0
  %v1237 = vmax.f32 %v1141, 0.0
  %v1238 = vmax.f32 %v1144, 0.0
  %v1239 = vmax.f32 %v1149, 0.0
  %v1240 = vmax.f32 %v1152, 0.0
  %v1241 = vmax.f32 %v1157, 0.0
  %v1242 = vmax.f32 %v1160, 0.0
  %v1243 = vmax.f32 %v1165, 0.0
  %v1244 = vmax.f32 %v1168, 0.0
  %v1245 = vmax.f32 %v1173, 0.0
  %v1246 = vmax.f32 %v1176, 0.0
  %v1247 = vmax.f32 %v1181, 0.0
  %v1248 = vmax.f32 %v1184, 0.0
  %v1249 = vmax.f32 %v1189, 0.0
  %v1250 = vmax.f32 %v1192, 0.0
  %v1251 = vmax.f32 %v1197, 0.0
  %v1252 = vmax.f32 %v1200, 0.0
  %v1253 = vmax.f32 %v1205, 0.0
  %v1254 = vmax.f32 %v1208, 0.0
  %v1255 = vmax.f32 %v1213, 0.0
  %v1256 = vmax.f32 %v1216, 0.0
  %v1257 = vmax.f32 %v1221, 0.0
  %v1258 = vmax.f32 %v1224, 0.0
  %v1259 = vpack.c.bf16 %v1228, %v1227
  %v1260 = vpack.c.bf16 %v1230, %v1229
  %v1261 = vpack.c.bf16 %v1232, %v1231
  %v1262 = vpack.c.bf16 %v1234, %v1233
  %v1263 = vpack.c.bf16 %v1236, %v1235
  %v1264 = vpack.c.bf16 %v1238, %v1237
  %v1265 = vpack.c.bf16 %v1240, %v1239
  %v1266 = vpack.c.bf16 %v1242, %v1241
  %v1267 = vpack.c.bf16 %v1244, %v1243
  %v1268 = vpack.c.bf16 %v1246, %v1245
  %v1269 = vpack.c.bf16 %v1248, %v1247
  %v1270 = vpack.c.bf16 %v1250, %v1249
  %v1271 = vpack.c.bf16 %v1252, %v1251
  %v1272 = vpack.c.bf16 %v1254, %v1253
  %v1273 = vpack.c.bf16 %v1256, %v1255
  %v1274 = vpack.c.bf16 %v1258, %v1257
  %v1275 = vld [vmem:[%s9] sm:$0xf]
  %v1276 = vld [vmem:[%s9 + $0x4] sm:$0xf]
  %v1277 = vld [vmem:[%s9 + $0x8] sm:$0xf]
  %v1278 = vld [vmem:[%s9 + $0xc] sm:$0xf]
  %v1279 = vld [vmem:[%s9 + $0x10] sm:$0xf]
  %v1280 = vld [vmem:[%s9 + $0x14] sm:$0xf]
  %v1281 = vld [vmem:[%s9 + $0x18] sm:$0xf]
  %v1282 = vld [vmem:[%s9 + $0x1c] sm:$0xf]
  %v1283 = vld [vmem:[%s10] sm:$0x1]
  %v1285 = vlaneseq
  %v1286 = vshrl.u32 %v1285, 7
  %v1287 = vsub.s32 0, %v1286
  %v1288 = vrot.slane %v1283, %v1287
  %v1298 = vunpack.c.l.b16 %v1275
  %v1299 = vunpack.c.l.b16 %v1276
  %v1300 = vunpack.c.l.b16 %v1277
  %v1301 = vunpack.c.l.b16 %v1278
  %v1302 = vunpack.c.l.b16 %v1279
  %v1303 = vunpack.c.l.b16 %v1280
  %v1304 = vunpack.c.l.b16 %v1281
  %v1305 = vunpack.c.l.b16 %v1282
  %v1306 = vpack.c.b16 %v1299, %v1298
  %v1307 = vpack.c.b16 %v1301, %v1300
  %v1308 = vpack.c.b16 %v1303, %v1302
  %v1309 = vpack.c.b16 %v1305, %v1304
  %v1315 = vsel %vm1017, %v1259, 0
  %v1318 = vsel %vm1017, %v1260, 0
  %v1321 = vsel %vm1017, %v1261, 0
  %v1324 = vsel %vm1017, %v1262, 0
  %v1327 = vsel %vm1017, %v1263, 0
  %v1330 = vsel %vm1017, %v1264, 0
  %v1333 = vsel %vm1017, %v1265, 0
  %v1336 = vsel %vm1017, %v1266, 0
  %v1339 = vsel %vm1017, %v1267, 0
  %v1342 = vsel %vm1017, %v1268, 0
  %v1345 = vsel %vm1017, %v1269, 0
  %v1348 = vsel %vm1017, %v1270, 0
  %v1351 = vsel %vm1017, %v1271, 0
  %v1354 = vsel %vm1017, %v1272, 0
  %v1357 = vsel %vm1017, %v1273, 0
  %v1360 = vsel %vm1017, %v1274, 0
  %1362 = vmatprep.subr.bf16.mxu0 0
  %1363 = vmatpush1.bf16.msra.mxu0 %v1306
  %1364 = vmatprep.subr.bf16.mxu0 0
  %1365 = vmatpush1.bf16.msra.mxu0 %v1307
  %1366 = vmatprep.subr.bf16.mxu0 0
  %1367 = vmatpush1.bf16.msra.mxu0 %v1308
  %1368 = vmatprep.subr.bf16.mxu0 0
  %1369 = vmatpush1.bf16.msra.mxu0 %v1309
  %1370 = vmatprep.subr.bf16.mxu0 0
  %1371 = vmatpush1.bf16.msra.mxu0 0
  %1372 = vmatprep.subr.bf16.mxu0 0
  %1373 = vmatpush1.bf16.msra.mxu0 0
  %1374 = vmatprep.subr.bf16.mxu0 0
  %1375 = vmatpush1.bf16.msra.mxu0 0
  %1376 = vmatprep.subr.bf16.mxu0 0
  %1377 = vmatpush1.bf16.msra.mxu0 0
  %1378 = vmatprep.subr.bf16.mxu0 0
  %1379 = vmatpush1.bf16.msra.mxu0 0
  %1380 = vmatprep.subr.bf16.mxu0 0
  %1381 = vmatpush1.bf16.msra.mxu0 0
  %1382 = vmatprep.subr.bf16.mxu0 0
  %1383 = vmatpush1.bf16.msra.mxu0 0
  %1384 = vmatprep.subr.bf16.mxu0 0
  %1385 = vmatpush1.bf16.msra.mxu0 0
  %1386 = vmatprep.subr.bf16.mxu0 0
  %1387 = vmatpush1.bf16.msra.mxu0 0
  %1388 = vmatprep.subr.bf16.mxu0 0
  %1389 = vmatpush1.bf16.msra.mxu0 0
  %1390 = vmatprep.subr.bf16.mxu0 0
  %1391 = vmatpush1.bf16.msra.mxu0 0
  %1392 = vmatprep.subr.bf16.mxu0 0
  %1393 = vmatpush1.bf16.msra.mxu0 0
  %1394 = vmatprep.mubr.bf16.mxu0 0
  %1395 = vmatmul.mubr.bf16.gmra.mrb[0].mxu0 %v1315
  %v1396 = vpop.f32.mrb[0].mxu0
  %v1397 = vadd.f32 %v1288, %v1396
  %v1398 = vpop.f32.mrb[0].mxu0
  %v1399 = vpop.f32.mrb[0].mxu0
  %v1400 = vadd.f32 %v1288, %v1399
  %v1401 = vpop.f32.mrb[0].mxu0
  %1402 = vmatprep.mubr.bf16.mxu0 0
  %1403 = vmatmul.mubr.bf16.gmra.mrb[0].mxu0 %v1318
  %v1404 = vpop.f32.mrb[0].mxu0
  %v1405 = vadd.f32 %v1288, %v1404
  %v1406 = vpop.f32.mrb[0].mxu0
  %v1407 = vpop.f32.mrb[0].mxu0
  %v1408 = vadd.f32 %v1288, %v1407
  %v1409 = vpop.f32.mrb[0].mxu0
  %1410 = vmatprep.mubr.bf16.mxu0 0
  %1411 = vmatmul.mubr.bf16.gmra.mrb[0].mxu0 %v1321
  %v1412 = vpop.f32.mrb[0].mxu0
  %v1413 = vadd.f32 %v1288, %v1412
  %v1414 = vpop.f32.mrb[0].mxu0
  %v1415 = vpop.f32.mrb[0].mxu0
  %v1416 = vadd.f32 %v1288, %v1415
  %v1417 = vpop.f32.mrb[0].mxu0
  %1418 = vmatprep.mubr.bf16.mxu0 0
  %1419 = vmatmul.mubr.bf16.gmra.mrb[0].mxu0 %v1324
  %v1420 = vpop.f32.mrb[0].mxu0
  %v1421 = vadd.f32 %v1288, %v1420
  %v1422 = vpop.f32.mrb[0].mxu0
  %v1423 = vpop.f32.mrb[0].mxu0
  %v1424 = vadd.f32 %v1288, %v1423
  %v1425 = vpop.f32.mrb[0].mxu0
  %1426 = vmatprep.mubr.bf16.mxu0 0
  %1427 = vmatmul.mubr.bf16.gmra.mrb[0].mxu0 %v1327
  %v1428 = vpop.f32.mrb[0].mxu0
  %v1429 = vadd.f32 %v1288, %v1428
  %v1430 = vpop.f32.mrb[0].mxu0
  %v1431 = vpop.f32.mrb[0].mxu0
  %v1432 = vadd.f32 %v1288, %v1431
  %v1433 = vpop.f32.mrb[0].mxu0
  %1434 = vmatprep.mubr.bf16.mxu0 0
  %1435 = vmatmul.mubr.bf16.gmra.mrb[0].mxu0 %v1330
  %v1436 = vpop.f32.mrb[0].mxu0
  %v1437 = vadd.f32 %v1288, %v1436
  %v1438 = vpop.f32.mrb[0].mxu0
  %v1439 = vpop.f32.mrb[0].mxu0
  %v1440 = vadd.f32 %v1288, %v1439
  %v1441 = vpop.f32.mrb[0].mxu0
  %1442 = vmatprep.mubr.bf16.mxu0 0
  %1443 = vmatmul.mubr.bf16.gmra.mrb[0].mxu0 %v1333
  %v1444 = vpop.f32.mrb[0].mxu0
  %v1445 = vadd.f32 %v1288, %v1444
  %v1446 = vpop.f32.mrb[0].mxu0
  %v1447 = vpop.f32.mrb[0].mxu0
  %v1448 = vadd.f32 %v1288, %v1447
  %v1449 = vpop.f32.mrb[0].mxu0
  %1450 = vmatprep.mubr.bf16.mxu0 0
  %1451 = vmatmul.mubr.bf16.gmra.mrb[0].mxu0 %v1336
  %v1452 = vpop.f32.mrb[0].mxu0
  %v1453 = vadd.f32 %v1288, %v1452
  %v1454 = vpop.f32.mrb[0].mxu0
  %v1455 = vpop.f32.mrb[0].mxu0
  %v1456 = vadd.f32 %v1288, %v1455
  %v1457 = vpop.f32.mrb[0].mxu0
  %1458 = vmatprep.mubr.bf16.mxu0 0
  %1459 = vmatmul.mubr.bf16.gmra.mrb[0].mxu0 %v1339
  %v1460 = vpop.f32.mrb[0].mxu0
  %v1461 = vadd.f32 %v1288, %v1460
  %v1462 = vpop.f32.mrb[0].mxu0
  %v1463 = vpop.f32.mrb[0].mxu0
  %v1464 = vadd.f32 %v1288, %v1463
  %v1465 = vpop.f32.mrb[0].mxu0
  %1466 = vmatprep.mubr.bf16.mxu0 0
  %1467 = vmatmul.mubr.bf16.gmra.mrb[0].mxu0 %v1342
  %v1468 = vpop.f32.mrb[0].mxu0
  %v1469 = vadd.f32 %v1288, %v1468
  %v1470 = vpop.f32.mrb[0].mxu0
  %v1471 = vpop.f32.mrb[0].mxu0
  %v1472 = vadd.f32 %v1288, %v1471
  %v1473 = vpop.f32.mrb[0].mxu0
  %1474 = vmatprep.mubr.bf16.mxu0 0
  %1475 = vmatmul.mubr.bf16.gmra.mrb[0].mxu0 %v1345
  %v1476 = vpop.f32.mrb[0].mxu0
  %v1477 = vadd.f32 %v1288, %v1476
  %v1478 = vpop.f32.mrb[0].mxu0
  %v1479 = vpop.f32.mrb[0].mxu0
  %v1480 = vadd.f32 %v1288, %v1479
  %v1481 = vpop.f32.mrb[0].mxu0
  %1482 = vmatprep.mubr.bf16.mxu0 0
  %1483 = vmatmul.mubr.bf16.gmra.mrb[0].mxu0 %v1348
  %v1484 = vpop.f32.mrb[0].mxu0
  %v1485 = vadd.f32 %v1288, %v1484
  %v1486 = vpop.f32.mrb[0].mxu0
  %v1487 = vpop.f32.mrb[0].mxu0
  %v1488 = vadd.f32 %v1288, %v1487
  %v1489 = vpop.f32.mrb[0].mxu0
  %1490 = vmatprep.mubr.bf16.mxu0 0
  %1491 = vmatmul.mubr.bf16.gmra.mrb[0].mxu0 %v1351
  %v1492 = vpop.f32.mrb[0].mxu0
  %v1493 = vadd.f32 %v1288, %v1492
  %v1494 = vpop.f32.mrb[0].mxu0
  %v1495 = vpop.f32.mrb[0].mxu0
  %v1496 = vadd.f32 %v1288, %v1495
  %v1497 = vpop.f32.mrb[0].mxu0
  %1498 = vmatprep.mubr.bf16.mxu0 0
  %1499 = vmatmul.mubr.bf16.gmra.mrb[0].mxu0 %v1354
  %v1500 = vpop.f32.mrb[0].mxu0
  %v1501 = vadd.f32 %v1288, %v1500
  %v1502 = vpop.f32.mrb[0].mxu0
  %v1503 = vpop.f32.mrb[0].mxu0
  %v1504 = vadd.f32 %v1288, %v1503
  %v1505 = vpop.f32.mrb[0].mxu0
  %1506 = vmatprep.mubr.bf16.mxu0 0
  %1507 = vmatmul.mubr.bf16.gmra.mrb[0].mxu0 %v1357
  %v1508 = vpop.f32.mrb[0].mxu0
  %v1509 = vadd.f32 %v1288, %v1508
  %v1510 = vpop.f32.mrb[0].mxu0
  %v1511 = vpop.f32.mrb[0].mxu0
  %v1512 = vadd.f32 %v1288, %v1511
  %v1513 = vpop.f32.mrb[0].mxu0
  %1514 = vmatprep.mubr.bf16.mxu0 0
  %1515 = vmatmul.mubr.bf16.gmra.mrb[0].mxu0 %v1360
  %v1516 = vpop.f32.mrb[0].mxu0
  %v1517 = vadd.f32 %v1288, %v1516
  %v1518 = vpop.f32.mrb[0].mxu0
  %v1519 = vpop.f32.mrb[0].mxu0
  %v1520 = vadd.f32 %v1288, %v1519
  %v1521 = vpop.f32.mrb[0].mxu0
  %1522 = vdwg.mxu0
  %v1523 = vmul.f32 %v1397, %v1397
  %v1524 = vmul.f32 %v1400, %v1400
  %v1525 = vmul.f32 %v1405, %v1405
  %v1526 = vmul.f32 %v1408, %v1408
  %v1527 = vmul.f32 %v1413, %v1413
  %v1528 = vmul.f32 %v1416, %v1416
  %v1529 = vmul.f32 %v1421, %v1421
  %v1530 = vmul.f32 %v1424, %v1424
  %v1531 = vmul.f32 %v1429, %v1429
  %v1532 = vmul.f32 %v1432, %v1432
  %v1533 = vmul.f32 %v1437, %v1437
  %v1534 = vmul.f32 %v1440, %v1440
  %v1535 = vmul.f32 %v1445, %v1445
  %v1536 = vmul.f32 %v1448, %v1448
  %v1537 = vmul.f32 %v1453, %v1453
  %v1538 = vmul.f32 %v1456, %v1456
  %v1539 = vmul.f32 %v1461, %v1461
  %v1540 = vmul.f32 %v1464, %v1464
  %v1541 = vmul.f32 %v1469, %v1469
  %v1542 = vmul.f32 %v1472, %v1472
  %v1543 = vmul.f32 %v1477, %v1477
  %v1544 = vmul.f32 %v1480, %v1480
  %v1545 = vmul.f32 %v1485, %v1485
  %v1546 = vmul.f32 %v1488, %v1488
  %v1547 = vmul.f32 %v1493, %v1493
  %v1548 = vmul.f32 %v1496, %v1496
  %v1549 = vmul.f32 %v1501, %v1501
  %v1550 = vmul.f32 %v1504, %v1504
  %v1551 = vmul.f32 %v1509, %v1509
  %v1552 = vmul.f32 %v1512, %v1512
  %v1553 = vmul.f32 %v1517, %v1517
  %v1554 = vmul.f32 %v1520, %v1520
  %v1555 = vsel %vm167, %v1523, 0.0
  %1556 = vadd.xlane.f32.xlu0 %v1555
  %v1557 = vpop.xlane.xlu0 %1556
  %v1558 = vsel %vm167, %v1524, 0.0
  %1559 = vadd.xlane.f32.xlu0 %v1558
  %v1560 = vpop.xlane.xlu0 %1559
  %v1561 = vsel %vm167, %v1525, 0.0
  %1562 = vadd.xlane.f32.xlu0 %v1561
  %v1563 = vpop.xlane.xlu0 %1562
  %v1564 = vsel %vm167, %v1526, 0.0
  %1565 = vadd.xlane.f32.xlu0 %v1564
  %v1566 = vpop.xlane.xlu0 %1565
  %v1567 = vsel %vm167, %v1527, 0.0
  %1568 = vadd.xlane.f32.xlu0 %v1567
  %v1569 = vpop.xlane.xlu0 %1568
  %v1570 = vsel %vm167, %v1528, 0.0
  %1571 = vadd.xlane.f32.xlu0 %v1570
  %v1572 = vpop.xlane.xlu0 %1571
  %v1573 = vsel %vm167, %v1529, 0.0
  %1574 = vadd.xlane.f32.xlu0 %v1573
  %v1575 = vpop.xlane.xlu0 %1574
  %v1576 = vsel %vm167, %v1530, 0.0
  %1577 = vadd.xlane.f32.xlu0 %v1576
  %v1578 = vpop.xlane.xlu0 %1577
  %v1579 = vsel %vm167, %v1531, 0.0
  %1580 = vadd.xlane.f32.xlu0 %v1579
  %v1581 = vpop.xlane.xlu0 %1580
  %v1582 = vsel %vm167, %v1532, 0.0
  %1583 = vadd.xlane.f32.xlu0 %v1582
  %v1584 = vpop.xlane.xlu0 %1583
  %v1585 = vsel %vm167, %v1533, 0.0
  %1586 = vadd.xlane.f32.xlu0 %v1585
  %v1587 = vpop.xlane.xlu0 %1586
  %v1588 = vsel %vm167, %v1534, 0.0
  %1589 = vadd.xlane.f32.xlu0 %v1588
  %v1590 = vpop.xlane.xlu0 %1589
  %v1591 = vsel %vm167, %v1535, 0.0
  %1592 = vadd.xlane.f32.xlu0 %v1591
  %v1593 = vpop.xlane.xlu0 %1592
  %v1594 = vsel %vm167, %v1536, 0.0
  %1595 = vadd.xlane.f32.xlu0 %v1594
  %v1596 = vpop.xlane.xlu0 %1595
  %v1597 = vsel %vm167, %v1537, 0.0
  %1598 = vadd.xlane.f32.xlu0 %v1597
  %v1599 = vpop.xlane.xlu0 %1598
  %v1600 = vsel %vm167, %v1538, 0.0
  %1601 = vadd.xlane.f32.xlu0 %v1600
  %v1602 = vpop.xlane.xlu0 %1601
  %v1603 = vsel %vm167, %v1539, 0.0
  %1604 = vadd.xlane.f32.xlu0 %v1603
  %v1605 = vpop.xlane.xlu0 %1604
  %v1606 = vsel %vm167, %v1540, 0.0
  %1607 = vadd.xlane.f32.xlu0 %v1606
  %v1608 = vpop.xlane.xlu0 %1607
  %v1609 = vsel %vm167, %v1541, 0.0
  %1610 = vadd.xlane.f32.xlu0 %v1609
  %v1611 = vpop.xlane.xlu0 %1610
  %v1612 = vsel %vm167, %v1542, 0.0
  %1613 = vadd.xlane.f32.xlu0 %v1612
  %v1614 = vpop.xlane.xlu0 %1613
  %v1615 = vsel %vm167, %v1543, 0.0
  %1616 = vadd.xlane.f32.xlu0 %v1615
  %v1617 = vpop.xlane.xlu0 %1616
  %v1618 = vsel %vm167, %v1544, 0.0
  %1619 = vadd.xlane.f32.xlu0 %v1618
  %v1620 = vpop.xlane.xlu0 %1619
  %v1621 = vsel %vm167, %v1545, 0.0
  %1622 = vadd.xlane.f32.xlu0 %v1621
  %v1623 = vpop.xlane.xlu0 %1622
  %v1624 = vsel %vm167, %v1546, 0.0
  %1625 = vadd.xlane.f32.xlu0 %v1624
  %v1626 = vpop.xlane.xlu0 %1625
  %v1627 = vsel %vm167, %v1547, 0.0
  %1628 = vadd.xlane.f32.xlu0 %v1627
  %v1629 = vpop.xlane.xlu0 %1628
  %v1630 = vsel %vm167, %v1548, 0.0
  %1631 = vadd.xlane.f32.xlu0 %v1630
  %v1632 = vpop.xlane.xlu0 %1631
  %v1633 = vsel %vm167, %v1549, 0.0
  %1634 = vadd.xlane.f32.xlu0 %v1633
  %v1635 = vpop.xlane.xlu0 %1634
  %v1636 = vsel %vm167, %v1550, 0.0
  %1637 = vadd.xlane.f32.xlu0 %v1636
  %v1638 = vpop.xlane.xlu0 %1637
  %v1639 = vsel %vm167, %v1551, 0.0
  %1640 = vadd.xlane.f32.xlu0 %v1639
  %v1641 = vpop.xlane.xlu0 %1640
  %v1642 = vsel %vm167, %v1552, 0.0
  %1643 = vadd.xlane.f32.xlu0 %v1642
  %v1644 = vpop.xlane.xlu0 %1643
  %v1645 = vsel %vm167, %v1553, 0.0
  %1646 = vadd.xlane.f32.xlu0 %v1645
  %v1647 = vpop.xlane.xlu0 %1646
  %v1648 = vsel %vm167, %v1554, 0.0
  %1649 = vadd.xlane.f32.xlu0 %v1648
  %v1650 = vpop.xlane.xlu0 %1649
  %v1651 = vrsqrt.pop %v1557
  %v1652 = vrsqrt.pop %v1560
  %v1653 = vrsqrt.pop %v1563
  %v1654 = vrsqrt.pop %v1566
  %v1655 = vrsqrt.pop %v1569
  %v1656 = vrsqrt.pop %v1572
  %v1657 = vrsqrt.pop %v1575
  %v1658 = vrsqrt.pop %v1578
  %v1659 = vrsqrt.pop %v1581
  %v1660 = vrsqrt.pop %v1584
  %v1661 = vrsqrt.pop %v1587
  %v1662 = vrsqrt.pop %v1590
  %v1663 = vrsqrt.pop %v1593
  %v1664 = vrsqrt.pop %v1596
  %v1665 = vrsqrt.pop %v1599
  %v1666 = vrsqrt.pop %v1602
  %v1667 = vrsqrt.pop %v1605
  %v1668 = vrsqrt.pop %v1608
  %v1669 = vrsqrt.pop %v1611
  %v1670 = vrsqrt.pop %v1614
  %v1671 = vrsqrt.pop %v1617
  %v1672 = vrsqrt.pop %v1620
  %v1673 = vrsqrt.pop %v1623
  %v1674 = vrsqrt.pop %v1626
  %v1675 = vrsqrt.pop %v1629
  %v1676 = vrsqrt.pop %v1632
  %v1677 = vrsqrt.pop %v1635
  %v1678 = vrsqrt.pop %v1638
  %v1679 = vrsqrt.pop %v1641
  %v1680 = vrsqrt.pop %v1644
  %v1681 = vrsqrt.pop %v1647
  %v1682 = vrsqrt.pop %v1650
  %v1683 = vmul.f32 %v1397, %v1651
  %v1684 = vmul.f32 %v1400, %v1652
  %v1685 = vmul.f32 %v1405, %v1653
  %v1686 = vmul.f32 %v1408, %v1654
  %v1687 = vmul.f32 %v1413, %v1655
  %v1688 = vmul.f32 %v1416, %v1656
  %v1689 = vmul.f32 %v1421, %v1657
  %v1690 = vmul.f32 %v1424, %v1658
  %v1691 = vmul.f32 %v1429, %v1659
  %v1692 = vmul.f32 %v1432, %v1660
  %v1693 = vmul.f32 %v1437, %v1661
  %v1694 = vmul.f32 %v1440, %v1662
  %v1695 = vmul.f32 %v1445, %v1663
  %v1696 = vmul.f32 %v1448, %v1664
  %v1697 = vmul.f32 %v1453, %v1665
  %v1698 = vmul.f32 %v1456, %v1666
  %v1699 = vmul.f32 %v1461, %v1667
  %v1700 = vmul.f32 %v1464, %v1668
  %v1701 = vmul.f32 %v1469, %v1669
  %v1702 = vmul.f32 %v1472, %v1670
  %v1703 = vmul.f32 %v1477, %v1671
  %v1704 = vmul.f32 %v1480, %v1672
  %v1705 = vmul.f32 %v1485, %v1673
  %v1706 = vmul.f32 %v1488, %v1674
  %v1707 = vmul.f32 %v1493, %v1675
  %v1708 = vmul.f32 %v1496, %v1676
  %v1709 = vmul.f32 %v1501, %v1677
  %v1710 = vmul.f32 %v1504, %v1678
  %v1711 = vmul.f32 %v1509, %v1679
  %v1712 = vmul.f32 %v1512, %v1680
  %v1713 = vmul.f32 %v1517, %v1681
  %v1714 = vmul.f32 %v1520, %v1682
  %1715 = vst.msk [vmem:[%s11] sm:$0xff] %vm167, %v1683
  %1716 = vst.msk [vmem:[%s11 + $0x8] sm:$0xff] %vm167, %v1684
  %1717 = vst.msk [vmem:[%s11 + $0x10] sm:$0xff] %vm167, %v1685
  %1718 = vst.msk [vmem:[%s11 + $0x18] sm:$0xff] %vm167, %v1686
  %1719 = vst.msk [vmem:[%s11 + $0x20] sm:$0xff] %vm167, %v1687
  %1720 = vst.msk [vmem:[%s11 + $0x28] sm:$0xff] %vm167, %v1688
  %1721 = vst.msk [vmem:[%s11 + $0x30] sm:$0xff] %vm167, %v1689
  %1722 = vst.msk [vmem:[%s11 + $0x38] sm:$0xff] %vm167, %v1690
  %1723 = vst.msk [vmem:[%s11 + $0x40] sm:$0xff] %vm167, %v1691
  %1724 = vst.msk [vmem:[%s11 + $0x48] sm:$0xff] %vm167, %v1692
  %1725 = vst.msk [vmem:[%s11 + $0x50] sm:$0xff] %vm167, %v1693
  %1726 = vst.msk [vmem:[%s11 + $0x58] sm:$0xff] %vm167, %v1694
  %1727 = vst.msk [vmem:[%s11 + $0x60] sm:$0xff] %vm167, %v1695
  %1728 = vst.msk [vmem:[%s11 + $0x68] sm:$0xff] %vm167, %v1696
  %1729 = vst.msk [vmem:[%s11 + $0x70] sm:$0xff] %vm167, %v1697
  %1730 = vst.msk [vmem:[%s11 + $0x78] sm:$0xff] %vm167, %v1698
  %1731 = vst.msk [vmem:[%s11 + $0x80] sm:$0xff] %vm167, %v1699
  %1732 = vst.msk [vmem:[%s11 + $0x88] sm:$0xff] %vm167, %v1700
  %1733 = vst.msk [vmem:[%s11 + $0x90] sm:$0xff] %vm167, %v1701
  %1734 = vst.msk [vmem:[%s11 + $0x98] sm:$0xff] %vm167, %v1702
  %1735 = vst.msk [vmem:[%s11 + $0xa0] sm:$0xff] %vm167, %v1703
  %1736 = vst.msk [vmem:[%s11 + $0xa8] sm:$0xff] %vm167, %v1704
  %1737 = vst.msk [vmem:[%s11 + $0xb0] sm:$0xff] %vm167, %v1705
  %1738 = vst.msk [vmem:[%s11 + $0xb8] sm:$0xff] %vm167, %v1706
  %1739 = vst.msk [vmem:[%s11 + $0xc0] sm:$0xff] %vm167, %v1707
  %1740 = vst.msk [vmem:[%s11 + $0xc8] sm:$0xff] %vm167, %v1708
  %1741 = vst.msk [vmem:[%s11 + $0xd0] sm:$0xff] %vm167, %v1709
  %1742 = vst.msk [vmem:[%s11 + $0xd8] sm:$0xff] %vm167, %v1710
  %1743 = vst.msk [vmem:[%s11 + $0xe0] sm:$0xff] %vm167, %v1711
  %1744 = vst.msk [vmem:[%s11 + $0xe8] sm:$0xff] %vm167, %v1712
  %1745 = vst.msk [vmem:[%s11 + $0xf0] sm:$0xff] %vm167, %v1713
  %1746 = vst.msk [vmem:[%s11 + $0xf8] sm:$0xff] %vm167, %v1714
  // Predicated region
  $region46: #{node_network_forward.1} parent=0 // pred_check
    _
  $region47: #{node_network_forward.1} parent=0 // pred_check_branch
    %1748 = sbr.rel (0) target = $region49
  $region48: #{node_network_forward.1} parent=0 // pred_region
    _
  $region49: #{node_network_forward.1} parent=0 // pred_fallthru
    _
  // Predicated region
  $region50: #{node_network_forward.1} parent=0 // pred_check
    _
  $region51: #{node_network_forward.1} parent=0 // pred_check_branch
    %1750 = sbr.rel (0) target = $region53
  $region52: #{node_network_forward.1} parent=0 // pred_region
    _
  $region53: #{node_network_forward.1} parent=0 // pred_fallthru
    _

</llo_original>
